<compile_context>
chip_gen: v7x
topology: tpu7x:2x2x1
jax: 0.10.0
libtpu: 0.0.40
codegen_flags: <defaults>
</compile_context>

<pallas_src>
import jax
import jax.numpy as jnp
from jax.experimental import pallas as pl
from jax.experimental.pallas import tpu as pltpu


_VMEM_LIMIT = 48 * 1024 * 1024  # < v7x 64 MiB physical, raises v5e's 16 MiB default


def _divisor_tile(dim, cap):
    """Largest tile <= cap that evenly divides dim."""
    t = min(dim, cap)
    while dim % t:
        t -= 1
    return t


def caption_lstm_kernel(emb_ref, fgate_ref, wie_ref, whh_ref, hs_ref, h_ref, c_ref):
    """One grid step == one block of Tc timesteps (grid axis = time blocks, 'arbitrary').

    gates_t = emb_t @ W_ih_emb^T + h @ W_hh^T + (features @ W_ih_feat^T + b)   [hoisted]
    """
    tb = pl.program_id(0)

    @pl.when(tb == 0)
    def _():
        h_ref[...] = jnp.zeros_like(h_ref)
        c_ref[...] = jnp.zeros_like(c_ref)

    H = h_ref.shape[-1]
    Tc = emb_ref.shape[1]

    fgate = fgate_ref[...]          # (B, 4H) hoisted features term + biases (loaded once)
    wie = wie_ref[...]              # (E, 4H) resident
    whh = whh_ref[...]              # (H, 4H) resident

    h = h_ref[...]
    c = c_ref[...]

    # Fully unrolled inner loop over the timestep block (Tc is a static Python int).
    for s in range(Tc):
        x_t = emb_ref[:, s, :]                                           # (B, E)
        gates = (jnp.dot(x_t, wie, preferred_element_type=jnp.float32)
                 + jnp.dot(h, whh, preferred_element_type=jnp.float32)
                 + fgate)                                                # (B, 4H)

        # PyTorch gate order: i, f, g, o.
        i_g = jax.nn.sigmoid(gates[:, 0 * H:1 * H])
        f_g = jax.nn.sigmoid(gates[:, 1 * H:2 * H])
        g_g = jnp.tanh(gates[:, 2 * H:3 * H])
        o_g = jax.nn.sigmoid(gates[:, 3 * H:4 * H])

        c = f_g * c + i_g * g_g
        h = o_g * jnp.tanh(c)

        hs_ref[:, s, :] = h                                              # batch-first write

    h_ref[...] = h
    c_ref[...] = c


def fc_proj_kernel(h_ref, w_ref, b_ref, out_ref):
    """logits tile = h_tile @ W_fc^T tile + b_fc tile (parallel GEMM, no recurrence)."""
    out_ref[...] = (jnp.dot(h_ref[...], w_ref[...], preferred_element_type=jnp.float32)
                    + b_ref[...])


def caption_generator_forward(captions, features, params, *, t_block=32):
    """captions: (B, T) int32, features: (B, hidden_dim) f32 -> (B, T, vocab) f32."""
    emb = params["embedding"][captions].astype(jnp.float32)   # (B, T, E)  glue gather
    B, T = captions.shape
    E = emb.shape[-1]
    H = params["whh_t"].shape[0]
    V = params["wfc_t"].shape[-1]

    # Split W_ih^T by input-concat order: [features (H) ; embedded (E)].
    wih_t = params["wih_t"]                                    # (H + E, 4H)
    wih_feat_t = wih_t[:H]                                     # rows multiplied by features
    wih_emb_t = wih_t[H:]                                      # rows multiplied by embeddings

    # Hoisted time-invariant term: features @ W_ih_feat^T + (b_ih + b_hh)  -> (B, 4H).
    feat_gates = (features.astype(jnp.float32) @ wih_feat_t
                  + params["b"]).astype(jnp.float32)

    Tc = _divisor_tile(T, t_block)
    n_tb = T // Tc

    # ---- Recurrent LSTM kernel: emits hidden states hs (B, T, H), batch-first. ----
    hs = pl.pallas_call(
        caption_lstm_kernel,
        out_shape=jax.ShapeDtypeStruct((B, T, H), jnp.float32),
        grid_spec=pltpu.PrefetchScalarGridSpec(
            num_scalar_prefetch=0,
            grid=(n_tb,),
            in_specs=[
                pl.BlockSpec((B, Tc, E), lambda tb: (0, tb, 0)),   # streamed embeddings
                pl.BlockSpec((B, 4 * H), lambda tb: (0, 0)),       # hoisted feat term + bias
                pl.BlockSpec((E, 4 * H), lambda tb: (0, 0)),       # W_ih(emb rows)^T resident
                pl.BlockSpec((H, 4 * H), lambda tb: (0, 0)),       # W_hh^T resident
            ],
            out_specs=pl.BlockSpec((B, Tc, H), lambda tb: (0, tb, 0)),
            scratch_shapes=[
                pltpu.VMEM((B, H), jnp.float32),                   # h carry
                pltpu.VMEM((B, H), jnp.float32),                   # c carry
            ],
        ),
        compiler_params=pltpu.CompilerParams(
            dimension_semantics=("arbitrary",),                    # sequential recurrence
            vmem_limit_bytes=_VMEM_LIMIT),
    )(emb, feat_gates, wih_emb_t, params["whh_t"])

    # ---- Output projection as a separate parallel GEMM over (B*T, H) x (H, V). ----
    M = B * T
    hs2 = hs.reshape(M, H)                                      # free: batch-first layout
    tm = _divisor_tile(M, 256)
    tn = _divisor_tile(V, 512)

    logits = pl.pallas_call(
        fc_proj_kernel,
        out_shape=jax.ShapeDtypeStruct((M, V), jnp.float32),
        grid_spec=pltpu.PrefetchScalarGridSpec(
            num_scalar_prefetch=0,
            grid=(M // tm, V // tn),
            in_specs=[
                pl.BlockSpec((tm, H), lambda i, j: (i, 0)),
                pl.BlockSpec((H, tn), lambda i, j: (0, j)),
                pl.BlockSpec((1, tn), lambda i, j: (0, j)),
            ],
            out_specs=pl.BlockSpec((tm, tn), lambda i, j: (i, j)),
        ),
        compiler_params=pltpu.CompilerParams(
            dimension_semantics=("parallel", "parallel"),
            vmem_limit_bytes=_VMEM_LIMIT),
    )(hs2, params["wfc_t"], params["bfc"])

    return logits.reshape(B, T, V)


def reference_forward(captions, features, params):
    """Pure-JAX reference mirroring the PyTorch forward (for a correctness check)."""
    emb = params["embedding"][captions]
    B, T, E = emb.shape
    H = params["whh_t"].shape[0]
    feats = jnp.broadcast_to(features[:, None, :], (B, T, H))
    x = jnp.concatenate([feats, emb], axis=2)
    x_tm = jnp.transpose(x, (1, 0, 2))

    def step(carry, x_t):
        h, c = carry
        gates = x_t @ params["wih_t"] + h @ params["whh_t"] + params["b"][0]
        i = jax.nn.sigmoid(gates[:, :H])
        f = jax.nn.sigmoid(gates[:, H:2 * H])
        g = jnp.tanh(gates[:, 2 * H:3 * H])
        o = jax.nn.sigmoid(gates[:, 3 * H:])
        c = f * c + i * g
        h = o * jnp.tanh(c)
        return (h, c), h

    init = (jnp.zeros((B, H), jnp.float32), jnp.zeros((B, H), jnp.float32))
    _, hs = jax.lax.scan(step, init, x_tm)                       # (T, B, H)
    out = hs @ params["wfc_t"] + params["bfc"][0]                # (T, B, V)
    return jnp.transpose(out, (1, 0, 2))


def init_params(key, vocab_size, embed_dim, hidden_dim):
    """Deterministic synthetic parameters with PyTorch-equivalent shapes."""
    D = embed_dim + hidden_dim
    H = hidden_dim
    k = jax.random.split(key, 7)
    s = 1.0 / jnp.sqrt(jnp.float32(H))
    # nn.LSTM weight_ih_l0: (4H, D); weight_hh_l0: (4H, H); biases (4H,) each.
    w_ih = jax.random.uniform(k[0], (4 * H, D), jnp.float32, -s, s)
    w_hh = jax.random.uniform(k[1], (4 * H, H), jnp.float32, -s, s)
    b_ih = jax.random.uniform(k[2], (4 * H,), jnp.float32, -s, s)
    b_hh = jax.random.uniform(k[3], (4 * H,), jnp.float32, -s, s)
    # nn.Linear: (V, H) weight, (V,) bias.
    w_fc = jax.random.uniform(k[4], (vocab_size, H), jnp.float32, -s, s)
    b_fc = jax.random.uniform(k[5], (vocab_size,), jnp.float32, -s, s)
    emb = jax.random.normal(k[6], (vocab_size, embed_dim), jnp.float32)
    return {
        "embedding": emb,
        "wih_t": jnp.transpose(w_ih),                  # (D, 4H) = ([H feat ; E emb], 4H)
        "whh_t": jnp.transpose(w_hh),                  # (H, 4H)
        "b": (b_ih + b_hh)[None, :],                   # (1, 4H)
        "wfc_t": jnp.transpose(w_fc),                  # (H, V)
        "bfc": b_fc[None, :],                          # (1, V)
    }


if __name__ == "__main__":
    vocab_size, embed_dim, hidden_dim = 64, 32, 32
    B, T = 2, 8

    root = jax.random.PRNGKey(0)
    kp, kc, kf = jax.random.split(root, 3)
    params = init_params(kp, vocab_size, embed_dim, hidden_dim)
    captions = jax.random.randint(kc, (B, T), 0, vocab_size, dtype=jnp.int32)
    features = jax.random.normal(kf, (B, hidden_dim), jnp.float32)

    out = caption_generator_forward(captions, features, params)
    out = jax.block_until_ready(out)

    ref = reference_forward(captions, features, params)
    assert out.shape == (B, T, vocab_size)
    assert jnp.allclose(out, ref, rtol=1e-4, atol=1e-4), "mismatch vs JAX reference"

    print("KERNEL_OK")
</pallas_src>

<mosaic_0001>
module attributes {stable_mosaic.version = 11 : i64} {
  func.func @caption_lstm_kernel(%arg0: i32, %arg1: memref<2x8x32xf32, #tpu.memory_space<vmem>>, %arg2: memref<2x128xf32, #tpu.memory_space<vmem>>, %arg3: memref<32x128xf32, #tpu.memory_space<vmem>>, %arg4: memref<32x128xf32, #tpu.memory_space<vmem>>, %arg5: memref<2x8x32xf32, #tpu.memory_space<vmem>>, %arg6: memref<2x32xf32, #tpu.memory_space<vmem>>, %arg7: memref<2x32xf32, #tpu.memory_space<vmem>>) attributes {dimension_semantics = [#tpu.dimension_semantics<arbitrary>], iteration_bounds = array<i64: 1>, scalar_prefetch = 0 : i64, scratch_operands = 2 : i64, tpu.core_type = #tpu.core_type<tc>, window_params = [{transform_indices = @transform_0, window_bounds = array<i64: 2, 8, 32>}, {pipeline_mode = #tpu.pipeline_mode<synchronous>, transform_indices = @transform_1, window_bounds = array<i64: 2, 128>}, {pipeline_mode = #tpu.pipeline_mode<synchronous>, transform_indices = @transform_2, window_bounds = array<i64: 32, 128>}, {pipeline_mode = #tpu.pipeline_mode<synchronous>, transform_indices = @transform_3, window_bounds = array<i64: 32, 128>}, {transform_indices = @transform_4, window_bounds = array<i64: 2, 8, 32>}]} {
    %c0_i32 = arith.constant 0 : i32
    %0 = arith.cmpi eq, %arg0, %c0_i32 : i32
    %1 = arith.extui %0 : i1 to i32
    %c0_i32_0 = arith.constant 0 : i32
    %2 = arith.cmpi ne, %1, %c0_i32_0 : i32
    scf.if %2 {
      %cst_94 = arith.constant 0.000000e+00 : f32
      %282 = vector.broadcast %cst_94 : f32 to vector<2x32xf32>
      %c0_95 = arith.constant 0 : index
      %c0_96 = arith.constant 0 : index
      %283 = vector.load %arg6[%c0_95, %c0_96] : memref<2x32xf32, #tpu.memory_space<vmem>>, vector<2x32xf32>
      tpu.vector_store %arg6[%c0_95, %c0_96], %282 {strides = array<i32>} : memref<2x32xf32, #tpu.memory_space<vmem>>, vector<2x32xf32>,
      %cst_97 = arith.constant 0.000000e+00 : f32
      %284 = vector.broadcast %cst_97 : f32 to vector<2x32xf32>
      %c0_98 = arith.constant 0 : index
      %c0_99 = arith.constant 0 : index
      %285 = vector.load %arg7[%c0_98, %c0_99] : memref<2x32xf32, #tpu.memory_space<vmem>>, vector<2x32xf32>
      tpu.vector_store %arg7[%c0_98, %c0_99], %284 {strides = array<i32>} : memref<2x32xf32, #tpu.memory_space<vmem>>, vector<2x32xf32>,
    } else {
    }
    %c0 = arith.constant 0 : index
    %c0_1 = arith.constant 0 : index
    %3 = vector.load %arg2[%c0, %c0_1] : memref<2x128xf32, #tpu.memory_space<vmem>>, vector<2x128xf32>
    %c0_2 = arith.constant 0 : index
    %c0_3 = arith.constant 0 : index
    %4 = vector.load %arg3[%c0_2, %c0_3] : memref<32x128xf32, #tpu.memory_space<vmem>>, vector<32x128xf32>
    %c0_4 = arith.constant 0 : index
    %c0_5 = arith.constant 0 : index
    %5 = vector.load %arg4[%c0_4, %c0_5] : memref<32x128xf32, #tpu.memory_space<vmem>>, vector<32x128xf32>
    %c0_6 = arith.constant 0 : index
    %c0_7 = arith.constant 0 : index
    %6 = vector.load %arg6[%c0_6, %c0_7] : memref<2x32xf32, #tpu.memory_space<vmem>>, vector<2x32xf32>
    %c0_8 = arith.constant 0 : index
    %c0_9 = arith.constant 0 : index
    %7 = vector.load %arg7[%c0_8, %c0_9] : memref<2x32xf32, #tpu.memory_space<vmem>>, vector<2x32xf32>
    %c0_10 = arith.constant 0 : index
    %c0_11 = arith.constant 0 : index
    %c0_12 = arith.constant 0 : index
    %8 = vector.load %arg1[%c0_10, %c0_11, %c0_12] : memref<2x8x32xf32, #tpu.memory_space<vmem>>, vector<2x1x32xf32>
    %9 = vector.shape_cast %8 : vector<2x1x32xf32> to vector<2x32xf32>
    %cst = arith.constant dense<0.000000e+00> : vector<2x128xf32>
    %10 = tpu.matmul %9, %4, %cst {dimension_numbers = #tpu.dot_dimension_numbers<[1], [0], [0], [1], [0, 0, 1, 1], [], []>} : vector<2x32xf32>, vector<32x128xf32>, vector<2x128xf32> -> vector<2x128xf32>
    %cst_13 = arith.constant dense<0.000000e+00> : vector<2x128xf32>
    %11 = tpu.matmul %6, %5, %cst_13 {dimension_numbers = #tpu.dot_dimension_numbers<[1], [0], [0], [1], [0, 0, 1, 1], [], []>} : vector<2x32xf32>, vector<32x128xf32>, vector<2x128xf32> -> vector<2x128xf32>
    %12 = arith.addf %10, %11 : vector<2x128xf32>
    %13 = arith.addf %12, %3 : vector<2x128xf32>
    %14 = vector.extract_strided_slice %13 {offsets = [0, 0], sizes = [2, 32], strides = [1, 1]} : vector<2x128xf32> to vector<2x32xf32>
    %15 = arith.negf %14 : vector<2x32xf32>
    %16 = math.exp %15 : vector<2x32xf32>
    %cst_14 = arith.constant 1.000000e+00 : f32
    %17 = vector.broadcast %cst_14 : f32 to vector<2x32xf32>
    %18 = arith.addf %17, %16 : vector<2x32xf32>
    %19 = arith.divf %17, %18 : vector<2x32xf32>
    %20 = vector.extract_strided_slice %13 {offsets = [0, 32], sizes = [2, 32], strides = [1, 1]} : vector<2x128xf32> to vector<2x32xf32>
    %21 = arith.negf %20 : vector<2x32xf32>
    %22 = math.exp %21 : vector<2x32xf32>
    %cst_15 = arith.constant 1.000000e+00 : f32
    %23 = vector.broadcast %cst_15 : f32 to vector<2x32xf32>
    %24 = arith.addf %23, %22 : vector<2x32xf32>
    %25 = arith.divf %23, %24 : vector<2x32xf32>
    %26 = vector.extract_strided_slice %13 {offsets = [0, 64], sizes = [2, 32], strides = [1, 1]} : vector<2x128xf32> to vector<2x32xf32>
    %27 = math.tanh %26 : vector<2x32xf32>
    %28 = vector.extract_strided_slice %13 {offsets = [0, 96], sizes = [2, 32], strides = [1, 1]} : vector<2x128xf32> to vector<2x32xf32>
    %29 = arith.negf %28 : vector<2x32xf32>
    %30 = math.exp %29 : vector<2x32xf32>
    %cst_16 = arith.constant 1.000000e+00 : f32
    %31 = vector.broadcast %cst_16 : f32 to vector<2x32xf32>
    %32 = arith.addf %31, %30 : vector<2x32xf32>
    %33 = arith.divf %31, %32 : vector<2x32xf32>
    %34 = arith.mulf %25, %7 : vector<2x32xf32>
    %35 = arith.mulf %19, %27 : vector<2x32xf32>
    %36 = arith.addf %34, %35 : vector<2x32xf32>
    %37 = math.tanh %36 : vector<2x32xf32>
    %38 = arith.mulf %33, %37 : vector<2x32xf32>
    %c0_17 = arith.constant 0 : index
    %c0_18 = arith.constant 0 : index
    %c0_19 = arith.constant 0 : index
    %39 = vector.load %arg5[%c0_17, %c0_18, %c0_19] : memref<2x8x32xf32, #tpu.memory_space<vmem>>, vector<2x1x32xf32>
    %40 = vector.shape_cast %39 : vector<2x1x32xf32> to vector<2x32xf32>
    %41 = vector.shape_cast %38 : vector<2x32xf32> to vector<2x1x32xf32>
    tpu.vector_store %arg5[%c0_17, %c0_18, %c0_19], %41 {strides = array<i32>} : memref<2x8x32xf32, #tpu.memory_space<vmem>>, vector<2x1x32xf32>,
    %c0_20 = arith.constant 0 : index
    %c1 = arith.constant 1 : index
    %c0_21 = arith.constant 0 : index
    %42 = vector.load %arg1[%c0_20, %c1, %c0_21] : memref<2x8x32xf32, #tpu.memory_space<vmem>>, vector<2x1x32xf32>
    %43 = vector.shape_cast %42 : vector<2x1x32xf32> to vector<2x32xf32>
    %cst_22 = arith.constant dense<0.000000e+00> : vector<2x128xf32>
    %44 = tpu.matmul %43, %4, %cst_22 {dimension_numbers = #tpu.dot_dimension_numbers<[1], [0], [0], [1], [0, 0, 1, 1], [], []>} : vector<2x32xf32>, vector<32x128xf32>, vector<2x128xf32> -> vector<2x128xf32>
    %cst_23 = arith.constant dense<0.000000e+00> : vector<2x128xf32>
    %45 = tpu.matmul %38, %5, %cst_23 {dimension_numbers = #tpu.dot_dimension_numbers<[1], [0], [0], [1], [0, 0, 1, 1], [], []>} : vector<2x32xf32>, vector<32x128xf32>, vector<2x128xf32> -> vector<2x128xf32>
    %46 = arith.addf %44, %45 : vector<2x128xf32>
    %47 = arith.addf %46, %3 : vector<2x128xf32>
    %48 = vector.extract_strided_slice %47 {offsets = [0, 0], sizes = [2, 32], strides = [1, 1]} : vector<2x128xf32> to vector<2x32xf32>
    %49 = arith.negf %48 : vector<2x32xf32>
    %50 = math.exp %49 : vector<2x32xf32>
    %cst_24 = arith.constant 1.000000e+00 : f32
    %51 = vector.broadcast %cst_24 : f32 to vector<2x32xf32>
    %52 = arith.addf %51, %50 : vector<2x32xf32>
    %53 = arith.divf %51, %52 : vector<2x32xf32>
    %54 = vector.extract_strided_slice %47 {offsets = [0, 32], sizes = [2, 32], strides = [1, 1]} : vector<2x128xf32> to vector<2x32xf32>
    %55 = arith.negf %54 : vector<2x32xf32>
    %56 = math.exp %55 : vector<2x32xf32>
    %cst_25 = arith.constant 1.000000e+00 : f32
    %57 = vector.broadcast %cst_25 : f32 to vector<2x32xf32>
    %58 = arith.addf %57, %56 : vector<2x32xf32>
    %59 = arith.divf %57, %58 : vector<2x32xf32>
    %60 = vector.extract_strided_slice %47 {offsets = [0, 64], sizes = [2, 32], strides = [1, 1]} : vector<2x128xf32> to vector<2x32xf32>
    %61 = math.tanh %60 : vector<2x32xf32>
    %62 = vector.extract_strided_slice %47 {offsets = [0, 96], sizes = [2, 32], strides = [1, 1]} : vector<2x128xf32> to vector<2x32xf32>
    %63 = arith.negf %62 : vector<2x32xf32>
    %64 = math.exp %63 : vector<2x32xf32>
    %cst_26 = arith.constant 1.000000e+00 : f32
    %65 = vector.broadcast %cst_26 : f32 to vector<2x32xf32>
    %66 = arith.addf %65, %64 : vector<2x32xf32>
    %67 = arith.divf %65, %66 : vector<2x32xf32>
    %68 = arith.mulf %59, %36 : vector<2x32xf32>
    %69 = arith.mulf %53, %61 : vector<2x32xf32>
    %70 = arith.addf %68, %69 : vector<2x32xf32>
    %71 = math.tanh %70 : vector<2x32xf32>
    %72 = arith.mulf %67, %71 : vector<2x32xf32>
    %c0_27 = arith.constant 0 : index
    %c1_28 = arith.constant 1 : index
    %c0_29 = arith.constant 0 : index
    %73 = vector.load %arg5[%c0_27, %c1_28, %c0_29] : memref<2x8x32xf32, #tpu.memory_space<vmem>>, vector<2x1x32xf32>
    %74 = vector.shape_cast %73 : vector<2x1x32xf32> to vector<2x32xf32>
    %75 = vector.shape_cast %72 : vector<2x32xf32> to vector<2x1x32xf32>
    tpu.vector_store %arg5[%c0_27, %c1_28, %c0_29], %75 {strides = array<i32>} : memref<2x8x32xf32, #tpu.memory_space<vmem>>, vector<2x1x32xf32>,
    %c0_30 = arith.constant 0 : index
    %c2 = arith.constant 2 : index
    %c0_31 = arith.constant 0 : index
    %76 = vector.load %arg1[%c0_30, %c2, %c0_31] : memref<2x8x32xf32, #tpu.memory_space<vmem>>, vector<2x1x32xf32>
    %77 = vector.shape_cast %76 : vector<2x1x32xf32> to vector<2x32xf32>
    %cst_32 = arith.constant dense<0.000000e+00> : vector<2x128xf32>
    %78 = tpu.matmul %77, %4, %cst_32 {dimension_numbers = #tpu.dot_dimension_numbers<[1], [0], [0], [1], [0, 0, 1, 1], [], []>} : vector<2x32xf32>, vector<32x128xf32>, vector<2x128xf32> -> vector<2x128xf32>
    %cst_33 = arith.constant dense<0.000000e+00> : vector<2x128xf32>
    %79 = tpu.matmul %72, %5, %cst_33 {dimension_numbers = #tpu.dot_dimension_numbers<[1], [0], [0], [1], [0, 0, 1, 1], [], []>} : vector<2x32xf32>, vector<32x128xf32>, vector<2x128xf32> -> vector<2x128xf32>
    %80 = arith.addf %78, %79 : vector<2x128xf32>
    %81 = arith.addf %80, %3 : vector<2x128xf32>
    %82 = vector.extract_strided_slice %81 {offsets = [0, 0], sizes = [2, 32], strides = [1, 1]} : vector<2x128xf32> to vector<2x32xf32>
    %83 = arith.negf %82 : vector<2x32xf32>
    %84 = math.exp %83 : vector<2x32xf32>
    %cst_34 = arith.constant 1.000000e+00 : f32
    %85 = vector.broadcast %cst_34 : f32 to vector<2x32xf32>
    %86 = arith.addf %85, %84 : vector<2x32xf32>
    %87 = arith.divf %85, %86 : vector<2x32xf32>
    %88 = vector.extract_strided_slice %81 {offsets = [0, 32], sizes = [2, 32], strides = [1, 1]} : vector<2x128xf32> to vector<2x32xf32>
    %89 = arith.negf %88 : vector<2x32xf32>
    %90 = math.exp %89 : vector<2x32xf32>
    %cst_35 = arith.constant 1.000000e+00 : f32
    %91 = vector.broadcast %cst_35 : f32 to vector<2x32xf32>
    %92 = arith.addf %91, %90 : vector<2x32xf32>
    %93 = arith.divf %91, %92 : vector<2x32xf32>
    %94 = vector.extract_strided_slice %81 {offsets = [0, 64], sizes = [2, 32], strides = [1, 1]} : vector<2x128xf32> to vector<2x32xf32>
    %95 = math.tanh %94 : vector<2x32xf32>
    %96 = vector.extract_strided_slice %81 {offsets = [0, 96], sizes = [2, 32], strides = [1, 1]} : vector<2x128xf32> to vector<2x32xf32>
    %97 = arith.negf %96 : vector<2x32xf32>
    %98 = math.exp %97 : vector<2x32xf32>
    %cst_36 = arith.constant 1.000000e+00 : f32
    %99 = vector.broadcast %cst_36 : f32 to vector<2x32xf32>
    %100 = arith.addf %99, %98 : vector<2x32xf32>
    %101 = arith.divf %99, %100 : vector<2x32xf32>
    %102 = arith.mulf %93, %70 : vector<2x32xf32>
    %103 = arith.mulf %87, %95 : vector<2x32xf32>
    %104 = arith.addf %102, %103 : vector<2x32xf32>
    %105 = math.tanh %104 : vector<2x32xf32>
    %106 = arith.mulf %101, %105 : vector<2x32xf32>
    %c0_37 = arith.constant 0 : index
    %c2_38 = arith.constant 2 : index
    %c0_39 = arith.constant 0 : index
    %107 = vector.load %arg5[%c0_37, %c2_38, %c0_39] : memref<2x8x32xf32, #tpu.memory_space<vmem>>, vector<2x1x32xf32>
    %108 = vector.shape_cast %107 : vector<2x1x32xf32> to vector<2x32xf32>
    %109 = vector.shape_cast %106 : vector<2x32xf32> to vector<2x1x32xf32>
    tpu.vector_store %arg5[%c0_37, %c2_38, %c0_39], %109 {strides = array<i32>} : memref<2x8x32xf32, #tpu.memory_space<vmem>>, vector<2x1x32xf32>,
    %c0_40 = arith.constant 0 : index
    %c3 = arith.constant 3 : index
    %c0_41 = arith.constant 0 : index
    %110 = vector.load %arg1[%c0_40, %c3, %c0_41] : memref<2x8x32xf32, #tpu.memory_space<vmem>>, vector<2x1x32xf32>
    %111 = vector.shape_cast %110 : vector<2x1x32xf32> to vector<2x32xf32>
    %cst_42 = arith.constant dense<0.000000e+00> : vector<2x128xf32>
    %112 = tpu.matmul %111, %4, %cst_42 {dimension_numbers = #tpu.dot_dimension_numbers<[1], [0], [0], [1], [0, 0, 1, 1], [], []>} : vector<2x32xf32>, vector<32x128xf32>, vector<2x128xf32> -> vector<2x128xf32>
    %cst_43 = arith.constant dense<0.000000e+00> : vector<2x128xf32>
    %113 = tpu.matmul %106, %5, %cst_43 {dimension_numbers = #tpu.dot_dimension_numbers<[1], [0], [0], [1], [0, 0, 1, 1], [], []>} : vector<2x32xf32>, vector<32x128xf32>, vector<2x128xf32> -> vector<2x128xf32>
    %114 = arith.addf %112, %113 : vector<2x128xf32>
    %115 = arith.addf %114, %3 : vector<2x128xf32>
    %116 = vector.extract_strided_slice %115 {offsets = [0, 0], sizes = [2, 32], strides = [1, 1]} : vector<2x128xf32> to vector<2x32xf32>
    %117 = arith.negf %116 : vector<2x32xf32>
    %118 = math.exp %117 : vector<2x32xf32>
    %cst_44 = arith.constant 1.000000e+00 : f32
    %119 = vector.broadcast %cst_44 : f32 to vector<2x32xf32>
    %120 = arith.addf %119, %118 : vector<2x32xf32>
    %121 = arith.divf %119, %120 : vector<2x32xf32>
    %122 = vector.extract_strided_slice %115 {offsets = [0, 32], sizes = [2, 32], strides = [1, 1]} : vector<2x128xf32> to vector<2x32xf32>
    %123 = arith.negf %122 : vector<2x32xf32>
    %124 = math.exp %123 : vector<2x32xf32>
    %cst_45 = arith.constant 1.000000e+00 : f32
    %125 = vector.broadcast %cst_45 : f32 to vector<2x32xf32>
    %126 = arith.addf %125, %124 : vector<2x32xf32>
    %127 = arith.divf %125, %126 : vector<2x32xf32>
    %128 = vector.extract_strided_slice %115 {offsets = [0, 64], sizes = [2, 32], strides = [1, 1]} : vector<2x128xf32> to vector<2x32xf32>
    %129 = math.tanh %128 : vector<2x32xf32>
    %130 = vector.extract_strided_slice %115 {offsets = [0, 96], sizes = [2, 32], strides = [1, 1]} : vector<2x128xf32> to vector<2x32xf32>
    %131 = arith.negf %130 : vector<2x32xf32>
    %132 = math.exp %131 : vector<2x32xf32>
    %cst_46 = arith.constant 1.000000e+00 : f32
    %133 = vector.broadcast %cst_46 : f32 to vector<2x32xf32>
    %134 = arith.addf %133, %132 : vector<2x32xf32>
    %135 = arith.divf %133, %134 : vector<2x32xf32>
    %136 = arith.mulf %127, %104 : vector<2x32xf32>
    %137 = arith.mulf %121, %129 : vector<2x32xf32>
    %138 = arith.addf %136, %137 : vector<2x32xf32>
    %139 = math.tanh %138 : vector<2x32xf32>
    %140 = arith.mulf %135, %139 : vector<2x32xf32>
    %c0_47 = arith.constant 0 : index
    %c3_48 = arith.constant 3 : index
    %c0_49 = arith.constant 0 : index
    %141 = vector.load %arg5[%c0_47, %c3_48, %c0_49] : memref<2x8x32xf32, #tpu.memory_space<vmem>>, vector<2x1x32xf32>
    %142 = vector.shape_cast %141 : vector<2x1x32xf32> to vector<2x32xf32>
    %143 = vector.shape_cast %140 : vector<2x32xf32> to vector<2x1x32xf32>
    tpu.vector_store %arg5[%c0_47, %c3_48, %c0_49], %143 {strides = array<i32>} : memref<2x8x32xf32, #tpu.memory_space<vmem>>, vector<2x1x32xf32>,
    %c0_50 = arith.constant 0 : index
    %c4 = arith.constant 4 : index
    %c0_51 = arith.constant 0 : index
    %144 = vector.load %arg1[%c0_50, %c4, %c0_51] : memref<2x8x32xf32, #tpu.memory_space<vmem>>, vector<2x1x32xf32>
    %145 = vector.shape_cast %144 : vector<2x1x32xf32> to vector<2x32xf32>
    %cst_52 = arith.constant dense<0.000000e+00> : vector<2x128xf32>
    %146 = tpu.matmul %145, %4, %cst_52 {dimension_numbers = #tpu.dot_dimension_numbers<[1], [0], [0], [1], [0, 0, 1, 1], [], []>} : vector<2x32xf32>, vector<32x128xf32>, vector<2x128xf32> -> vector<2x128xf32>
    %cst_53 = arith.constant dense<0.000000e+00> : vector<2x128xf32>
    %147 = tpu.matmul %140, %5, %cst_53 {dimension_numbers = #tpu.dot_dimension_numbers<[1], [0], [0], [1], [0, 0, 1, 1], [], []>} : vector<2x32xf32>, vector<32x128xf32>, vector<2x128xf32> -> vector<2x128xf32>
    %148 = arith.addf %146, %147 : vector<2x128xf32>
    %149 = arith.addf %148, %3 : vector<2x128xf32>
    %150 = vector.extract_strided_slice %149 {offsets = [0, 0], sizes = [2, 32], strides = [1, 1]} : vector<2x128xf32> to vector<2x32xf32>
    %151 = arith.negf %150 : vector<2x32xf32>
    %152 = math.exp %151 : vector<2x32xf32>
    %cst_54 = arith.constant 1.000000e+00 : f32
    %153 = vector.broadcast %cst_54 : f32 to vector<2x32xf32>
    %154 = arith.addf %153, %152 : vector<2x32xf32>
    %155 = arith.divf %153, %154 : vector<2x32xf32>
    %156 = vector.extract_strided_slice %149 {offsets = [0, 32], sizes = [2, 32], strides = [1, 1]} : vector<2x128xf32> to vector<2x32xf32>
    %157 = arith.negf %156 : vector<2x32xf32>
    %158 = math.exp %157 : vector<2x32xf32>
    %cst_55 = arith.constant 1.000000e+00 : f32
    %159 = vector.broadcast %cst_55 : f32 to vector<2x32xf32>
    %160 = arith.addf %159, %158 : vector<2x32xf32>
    %161 = arith.divf %159, %160 : vector<2x32xf32>
    %162 = vector.extract_strided_slice %149 {offsets = [0, 64], sizes = [2, 32], strides = [1, 1]} : vector<2x128xf32> to vector<2x32xf32>
    %163 = math.tanh %162 : vector<2x32xf32>
    %164 = vector.extract_strided_slice %149 {offsets = [0, 96], sizes = [2, 32], strides = [1, 1]} : vector<2x128xf32> to vector<2x32xf32>
    %165 = arith.negf %164 : vector<2x32xf32>
    %166 = math.exp %165 : vector<2x32xf32>
    %cst_56 = arith.constant 1.000000e+00 : f32
    %167 = vector.broadcast %cst_56 : f32 to vector<2x32xf32>
    %168 = arith.addf %167, %166 : vector<2x32xf32>
    %169 = arith.divf %167, %168 : vector<2x32xf32>
    %170 = arith.mulf %161, %138 : vector<2x32xf32>
    %171 = arith.mulf %155, %163 : vector<2x32xf32>
    %172 = arith.addf %170, %171 : vector<2x32xf32>
    %173 = math.tanh %172 : vector<2x32xf32>
    %174 = arith.mulf %169, %173 : vector<2x32xf32>
    %c0_57 = arith.constant 0 : index
    %c4_58 = arith.constant 4 : index
    %c0_59 = arith.constant 0 : index
    %175 = vector.load %arg5[%c0_57, %c4_58, %c0_59] : memref<2x8x32xf32, #tpu.memory_space<vmem>>, vector<2x1x32xf32>
    %176 = vector.shape_cast %175 : vector<2x1x32xf32> to vector<2x32xf32>
    %177 = vector.shape_cast %174 : vector<2x32xf32> to vector<2x1x32xf32>
    tpu.vector_store %arg5[%c0_57, %c4_58, %c0_59], %177 {strides = array<i32>} : memref<2x8x32xf32, #tpu.memory_space<vmem>>, vector<2x1x32xf32>,
    %c0_60 = arith.constant 0 : index
    %c5 = arith.constant 5 : index
    %c0_61 = arith.constant 0 : index
    %178 = vector.load %arg1[%c0_60, %c5, %c0_61] : memref<2x8x32xf32, #tpu.memory_space<vmem>>, vector<2x1x32xf32>
    %179 = vector.shape_cast %178 : vector<2x1x32xf32> to vector<2x32xf32>
    %cst_62 = arith.constant dense<0.000000e+00> : vector<2x128xf32>
    %180 = tpu.matmul %179, %4, %cst_62 {dimension_numbers = #tpu.dot_dimension_numbers<[1], [0], [0], [1], [0, 0, 1, 1], [], []>} : vector<2x32xf32>, vector<32x128xf32>, vector<2x128xf32> -> vector<2x128xf32>
    %cst_63 = arith.constant dense<0.000000e+00> : vector<2x128xf32>
    %181 = tpu.matmul %174, %5, %cst_63 {dimension_numbers = #tpu.dot_dimension_numbers<[1], [0], [0], [1], [0, 0, 1, 1], [], []>} : vector<2x32xf32>, vector<32x128xf32>, vector<2x128xf32> -> vector<2x128xf32>
    %182 = arith.addf %180, %181 : vector<2x128xf32>
    %183 = arith.addf %182, %3 : vector<2x128xf32>
    %184 = vector.extract_strided_slice %183 {offsets = [0, 0], sizes = [2, 32], strides = [1, 1]} : vector<2x128xf32> to vector<2x32xf32>
    %185 = arith.negf %184 : vector<2x32xf32>
    %186 = math.exp %185 : vector<2x32xf32>
    %cst_64 = arith.constant 1.000000e+00 : f32
    %187 = vector.broadcast %cst_64 : f32 to vector<2x32xf32>
    %188 = arith.addf %187, %186 : vector<2x32xf32>
    %189 = arith.divf %187, %188 : vector<2x32xf32>
    %190 = vector.extract_strided_slice %183 {offsets = [0, 32], sizes = [2, 32], strides = [1, 1]} : vector<2x128xf32> to vector<2x32xf32>
    %191 = arith.negf %190 : vector<2x32xf32>
    %192 = math.exp %191 : vector<2x32xf32>
    %cst_65 = arith.constant 1.000000e+00 : f32
    %193 = vector.broadcast %cst_65 : f32 to vector<2x32xf32>
    %194 = arith.addf %193, %192 : vector<2x32xf32>
    %195 = arith.divf %193, %194 : vector<2x32xf32>
    %196 = vector.extract_strided_slice %183 {offsets = [0, 64], sizes = [2, 32], strides = [1, 1]} : vector<2x128xf32> to vector<2x32xf32>
    %197 = math.tanh %196 : vector<2x32xf32>
    %198 = vector.extract_strided_slice %183 {offsets = [0, 96], sizes = [2, 32], strides = [1, 1]} : vector<2x128xf32> to vector<2x32xf32>
    %199 = arith.negf %198 : vector<2x32xf32>
    %200 = math.exp %199 : vector<2x32xf32>
    %cst_66 = arith.constant 1.000000e+00 : f32
    %201 = vector.broadcast %cst_66 : f32 to vector<2x32xf32>
    %202 = arith.addf %201, %200 : vector<2x32xf32>
    %203 = arith.divf %201, %202 : vector<2x32xf32>
    %204 = arith.mulf %195, %172 : vector<2x32xf32>
    %205 = arith.mulf %189, %197 : vector<2x32xf32>
    %206 = arith.addf %204, %205 : vector<2x32xf32>
    %207 = math.tanh %206 : vector<2x32xf32>
    %208 = arith.mulf %203, %207 : vector<2x32xf32>
    %c0_67 = arith.constant 0 : index
    %c5_68 = arith.constant 5 : index
    %c0_69 = arith.constant 0 : index
    %209 = vector.load %arg5[%c0_67, %c5_68, %c0_69] : memref<2x8x32xf32, #tpu.memory_space<vmem>>, vector<2x1x32xf32>
    %210 = vector.shape_cast %209 : vector<2x1x32xf32> to vector<2x32xf32>
    %211 = vector.shape_cast %208 : vector<2x32xf32> to vector<2x1x32xf32>
    tpu.vector_store %arg5[%c0_67, %c5_68, %c0_69], %211 {strides = array<i32>} : memref<2x8x32xf32, #tpu.memory_space<vmem>>, vector<2x1x32xf32>,
    %c0_70 = arith.constant 0 : index
    %c6 = arith.constant 6 : index
    %c0_71 = arith.constant 0 : index
    %212 = vector.load %arg1[%c0_70, %c6, %c0_71] : memref<2x8x32xf32, #tpu.memory_space<vmem>>, vector<2x1x32xf32>
    %213 = vector.shape_cast %212 : vector<2x1x32xf32> to vector<2x32xf32>
    %cst_72 = arith.constant dense<0.000000e+00> : vector<2x128xf32>
    %214 = tpu.matmul %213, %4, %cst_72 {dimension_numbers = #tpu.dot_dimension_numbers<[1], [0], [0], [1], [0, 0, 1, 1], [], []>} : vector<2x32xf32>, vector<32x128xf32>, vector<2x128xf32> -> vector<2x128xf32>
    %cst_73 = arith.constant dense<0.000000e+00> : vector<2x128xf32>
    %215 = tpu.matmul %208, %5, %cst_73 {dimension_numbers = #tpu.dot_dimension_numbers<[1], [0], [0], [1], [0, 0, 1, 1], [], []>} : vector<2x32xf32>, vector<32x128xf32>, vector<2x128xf32> -> vector<2x128xf32>
    %216 = arith.addf %214, %215 : vector<2x128xf32>
    %217 = arith.addf %216, %3 : vector<2x128xf32>
    %218 = vector.extract_strided_slice %217 {offsets = [0, 0], sizes = [2, 32], strides = [1, 1]} : vector<2x128xf32> to vector<2x32xf32>
    %219 = arith.negf %218 : vector<2x32xf32>
    %220 = math.exp %219 : vector<2x32xf32>
    %cst_74 = arith.constant 1.000000e+00 : f32
    %221 = vector.broadcast %cst_74 : f32 to vector<2x32xf32>
    %222 = arith.addf %221, %220 : vector<2x32xf32>
    %223 = arith.divf %221, %222 : vector<2x32xf32>
    %224 = vector.extract_strided_slice %217 {offsets = [0, 32], sizes = [2, 32], strides = [1, 1]} : vector<2x128xf32> to vector<2x32xf32>
    %225 = arith.negf %224 : vector<2x32xf32>
    %226 = math.exp %225 : vector<2x32xf32>
    %cst_75 = arith.constant 1.000000e+00 : f32
    %227 = vector.broadcast %cst_75 : f32 to vector<2x32xf32>
    %228 = arith.addf %227, %226 : vector<2x32xf32>
    %229 = arith.divf %227, %228 : vector<2x32xf32>
    %230 = vector.extract_strided_slice %217 {offsets = [0, 64], sizes = [2, 32], strides = [1, 1]} : vector<2x128xf32> to vector<2x32xf32>
    %231 = math.tanh %230 : vector<2x32xf32>
    %232 = vector.extract_strided_slice %217 {offsets = [0, 96], sizes = [2, 32], strides = [1, 1]} : vector<2x128xf32> to vector<2x32xf32>
    %233 = arith.negf %232 : vector<2x32xf32>
    %234 = math.exp %233 : vector<2x32xf32>
    %cst_76 = arith.constant 1.000000e+00 : f32
    %235 = vector.broadcast %cst_76 : f32 to vector<2x32xf32>
    %236 = arith.addf %235, %234 : vector<2x32xf32>
    %237 = arith.divf %235, %236 : vector<2x32xf32>
    %238 = arith.mulf %229, %206 : vector<2x32xf32>
    %239 = arith.mulf %223, %231 : vector<2x32xf32>
    %240 = arith.addf %238, %239 : vector<2x32xf32>
    %241 = math.tanh %240 : vector<2x32xf32>
    %242 = arith.mulf %237, %241 : vector<2x32xf32>
    %c0_77 = arith.constant 0 : index
    %c6_78 = arith.constant 6 : index
    %c0_79 = arith.constant 0 : index
    %243 = vector.load %arg5[%c0_77, %c6_78, %c0_79] : memref<2x8x32xf32, #tpu.memory_space<vmem>>, vector<2x1x32xf32>
    %244 = vector.shape_cast %243 : vector<2x1x32xf32> to vector<2x32xf32>
    %245 = vector.shape_cast %242 : vector<2x32xf32> to vector<2x1x32xf32>
    tpu.vector_store %arg5[%c0_77, %c6_78, %c0_79], %245 {strides = array<i32>} : memref<2x8x32xf32, #tpu.memory_space<vmem>>, vector<2x1x32xf32>,
    %c0_80 = arith.constant 0 : index
    %c7 = arith.constant 7 : index
    %c0_81 = arith.constant 0 : index
    %246 = vector.load %arg1[%c0_80, %c7, %c0_81] : memref<2x8x32xf32, #tpu.memory_space<vmem>>, vector<2x1x32xf32>
    %247 = vector.shape_cast %246 : vector<2x1x32xf32> to vector<2x32xf32>
    %cst_82 = arith.constant dense<0.000000e+00> : vector<2x128xf32>
    %248 = tpu.matmul %247, %4, %cst_82 {dimension_numbers = #tpu.dot_dimension_numbers<[1], [0], [0], [1], [0, 0, 1, 1], [], []>} : vector<2x32xf32>, vector<32x128xf32>, vector<2x128xf32> -> vector<2x128xf32>
    %cst_83 = arith.constant dense<0.000000e+00> : vector<2x128xf32>
    %249 = tpu.matmul %242, %5, %cst_83 {dimension_numbers = #tpu.dot_dimension_numbers<[1], [0], [0], [1], [0, 0, 1, 1], [], []>} : vector<2x32xf32>, vector<32x128xf32>, vector<2x128xf32> -> vector<2x128xf32>
    %250 = arith.addf %248, %249 : vector<2x128xf32>
    %251 = arith.addf %250, %3 : vector<2x128xf32>
    %252 = vector.extract_strided_slice %251 {offsets = [0, 0], sizes = [2, 32], strides = [1, 1]} : vector<2x128xf32> to vector<2x32xf32>
    %253 = arith.negf %252 : vector<2x32xf32>
    %254 = math.exp %253 : vector<2x32xf32>
    %cst_84 = arith.constant 1.000000e+00 : f32
    %255 = vector.broadcast %cst_84 : f32 to vector<2x32xf32>
    %256 = arith.addf %255, %254 : vector<2x32xf32>
    %257 = arith.divf %255, %256 : vector<2x32xf32>
    %258 = vector.extract_strided_slice %251 {offsets = [0, 32], sizes = [2, 32], strides = [1, 1]} : vector<2x128xf32> to vector<2x32xf32>
    %259 = arith.negf %258 : vector<2x32xf32>
    %260 = math.exp %259 : vector<2x32xf32>
    %cst_85 = arith.constant 1.000000e+00 : f32
    %261 = vector.broadcast %cst_85 : f32 to vector<2x32xf32>
    %262 = arith.addf %261, %260 : vector<2x32xf32>
    %263 = arith.divf %261, %262 : vector<2x32xf32>
    %264 = vector.extract_strided_slice %251 {offsets = [0, 64], sizes = [2, 32], strides = [1, 1]} : vector<2x128xf32> to vector<2x32xf32>
    %265 = math.tanh %264 : vector<2x32xf32>
    %266 = vector.extract_strided_slice %251 {offsets = [0, 96], sizes = [2, 32], strides = [1, 1]} : vector<2x128xf32> to vector<2x32xf32>
    %267 = arith.negf %266 : vector<2x32xf32>
    %268 = math.exp %267 : vector<2x32xf32>
    %cst_86 = arith.constant 1.000000e+00 : f32
    %269 = vector.broadcast %cst_86 : f32 to vector<2x32xf32>
    %270 = arith.addf %269, %268 : vector<2x32xf32>
    %271 = arith.divf %269, %270 : vector<2x32xf32>
    %272 = arith.mulf %263, %240 : vector<2x32xf32>
    %273 = arith.mulf %257, %265 : vector<2x32xf32>
    %274 = arith.addf %272, %273 : vector<2x32xf32>
    %275 = math.tanh %274 : vector<2x32xf32>
    %276 = arith.mulf %271, %275 : vector<2x32xf32>
    %c0_87 = arith.constant 0 : index
    %c7_88 = arith.constant 7 : index
    %c0_89 = arith.constant 0 : index
    %277 = vector.load %arg5[%c0_87, %c7_88, %c0_89] : memref<2x8x32xf32, #tpu.memory_space<vmem>>, vector<2x1x32xf32>
    %278 = vector.shape_cast %277 : vector<2x1x32xf32> to vector<2x32xf32>
    %279 = vector.shape_cast %276 : vector<2x32xf32> to vector<2x1x32xf32>
    tpu.vector_store %arg5[%c0_87, %c7_88, %c0_89], %279 {strides = array<i32>} : memref<2x8x32xf32, #tpu.memory_space<vmem>>, vector<2x1x32xf32>,
    %c0_90 = arith.constant 0 : index
    %c0_91 = arith.constant 0 : index
    %280 = vector.load %arg6[%c0_90, %c0_91] : memref<2x32xf32, #tpu.memory_space<vmem>>, vector<2x32xf32>
    tpu.vector_store %arg6[%c0_90, %c0_91], %276 {strides = array<i32>} : memref<2x32xf32, #tpu.memory_space<vmem>>, vector<2x32xf32>,
    %c0_92 = arith.constant 0 : index
    %c0_93 = arith.constant 0 : index
    %281 = vector.load %arg7[%c0_92, %c0_93] : memref<2x32xf32, #tpu.memory_space<vmem>>, vector<2x32xf32>
    tpu.vector_store %arg7[%c0_92, %c0_93], %274 {strides = array<i32>} : memref<2x32xf32, #tpu.memory_space<vmem>>, vector<2x32xf32>,
    return
  }
  func.func @transform_0(%arg0: i32) -> (i32, i32, i32) {
    %c0_i32 = arith.constant 0 : i32
    %c0_i32_0 = arith.constant 0 : i32
    %c0_i32_1 = arith.constant 0 : i32
    return %c0_i32, %arg0, %c0_i32_0 : i32, i32, i32
  }
  func.func @transform_1(%arg0: i32) -> (i32, i32) {
    %c0_i32 = arith.constant 0 : i32
    %c0_i32_0 = arith.constant 0 : i32
    %c0_i32_1 = arith.constant 0 : i32
    return %c0_i32, %c0_i32_0 : i32, i32
  }
  func.func @transform_2(%arg0: i32) -> (i32, i32) {
    %c0_i32 = arith.constant 0 : i32
    %c0_i32_0 = arith.constant 0 : i32
    %c0_i32_1 = arith.constant 0 : i32
    return %c0_i32, %c0_i32_0 : i32, i32
  }
  func.func @transform_3(%arg0: i32) -> (i32, i32) {
    %c0_i32 = arith.constant 0 : i32
    %c0_i32_0 = arith.constant 0 : i32
    %c0_i32_1 = arith.constant 0 : i32
    return %c0_i32, %c0_i32_0 : i32, i32
  }
  func.func @transform_4(%arg0: i32) -> (i32, i32, i32) {
    %c0_i32 = arith.constant 0 : i32
    %c0_i32_0 = arith.constant 0 : i32
    %c0_i32_1 = arith.constant 0 : i32
    return %c0_i32, %arg0, %c0_i32_0 : i32, i32, i32
  }
}

</mosaic_0001>

<llo_original>
// kernel: tpu_custom_call.1
$region0: #{tpu_custom_call.1}
  #allocation0 [shape = 'u32[]', space=smem, size = 0x4, offset = 0x4, fixed_abs, tag = 'smem constant byte address 0x4 - core index']
  #allocation1 [shape = 'u32[144,128]{1,0:T(1,128)}', space=vmem, size = 0x12000, scoped, tag = 'internal scratch']
  #allocation2 [shape = 'f32[2,32]{1,0:T(2,128)}', space=vmem, size = 0x400, scoped, tag = 'scratch operand']
  #allocation3 [shape = 'f32[2,32]{1,0:T(2,128)}', space=vmem, size = 0x400, scoped, tag = 'scratch operand']
  %s0 = inlined_call_operand.hbm [shape: f32[2,8,32], index: 0, kind: input, shape index: {}]
  %s1 = inlined_call_operand.vmem [shape: f32[2,128], index: 1, kind: input, shape index: {}]
  %s2 = inlined_call_operand.hbm [shape: f32[32,128], index: 2, kind: input, shape index: {}]
  %s3 = inlined_call_operand.hbm [shape: f32[32,128], index: 3, kind: input, shape index: {}]
  %s4 = inlined_call_operand.hbm [shape: f32[2,8,32], index: 4, kind: output, shape index: {}]
  %s5 = sld [smem:[#allocation0]]
  $region42: #{tpu_custom_call.1} parent=0
    _
  %s7 = ssub.s32 1, %s5
  %s8 = scalar_select 0, %s7, %s5
  $region1: #{tpu_custom_call.1} parent=0
    #allocation4 [shape = 'u8[8192]{0}', space=vmem, size = 0x2000, scoped, tag = 'input window, operand 0, single buffered']
    #allocation5 [shape = 's32[1]{0}', space=sflag, size = 0x4, scoped, tag = 'scoped memory for tpu_custom_call.1']
    #allocation6 [shape = 's32[1]{0}', space=sflag, size = 0x4, scoped, tag = 'scoped memory for tpu_custom_call.1']
    #allocation7 [shape = 'u8[16384]{0}', space=vmem, size = 0x4000, scoped, tag = 'input window, operand 2, single buffered']
    #allocation8 [shape = 's32[1]{0}', space=sflag, size = 0x4, scoped, tag = 'scoped memory for tpu_custom_call.1']
    #allocation9 [shape = 'u8[16384]{0}', space=vmem, size = 0x4000, scoped, tag = 'input window, operand 3, single buffered']
    #allocation10 [shape = 'u8[8192]{0}', space=vmem, size = 0x2000, scoped, tag = 'output window, operand 0, single buffered']
    %9 = vsyncpa [#allocation5], 0
    %10 = vsyncpa [#allocation8], 0
    %11 = vsyncpa [#allocation6], 0
    // Predicated region
    $region2: #{tpu_custom_call.1} parent=1 // pred_check
      _
    $region3: #{tpu_custom_call.1} parent=1 // pred_check_branch
      %13 = sbr.rel (0) target = $region5
    $region4: #{tpu_custom_call.1} parent=1 // pred_region
      %s15 = ssub.s32 256, 256
      %16 = vsyncadd [#allocation5], %s15
      %s17 = sshll.u32 [#allocation4], 4
      %s18 = int_to_ptr.vmem [resolvable:$true] %s17
      %23 = dma.hbm_to_vmem [thread:$0]  %s0, 256, %s18, [#allocation5], 128, 128, 8
    $region5: #{tpu_custom_call.1} parent=1 // pred_fallthru
      _
    // Predicated region
    $region6: #{tpu_custom_call.1} parent=1 // pred_check
      _
    $region7: #{tpu_custom_call.1} parent=1 // pred_check_branch
      %25 = sbr.rel (0) target = $region9
    $region8: #{tpu_custom_call.1} parent=1 // pred_region
      _
    $region9: #{tpu_custom_call.1} parent=1 // pred_fallthru
      _
    // Predicated region
    $region10: #{tpu_custom_call.1} parent=1 // pred_check
      _
    $region11: #{tpu_custom_call.1} parent=1 // pred_check_branch
      %27 = sbr.rel (0) target = $region13
    $region12: #{tpu_custom_call.1} parent=1 // pred_region
      %s29 = ssub.s32 512, 512
      %30 = vsyncadd [#allocation8], %s29
      %s31 = sshll.u32 [#allocation7], 4
      %s32 = int_to_ptr.vmem [resolvable:$true] %s31
      %37 = dma.hbm_to_vmem [thread:$0]  %s2, 512, %s32, [#allocation8], 128, 128, 8
    $region13: #{tpu_custom_call.1} parent=1 // pred_fallthru
      _
    // Predicated region
    $region14: #{tpu_custom_call.1} parent=1 // pred_check
      _
    $region15: #{tpu_custom_call.1} parent=1 // pred_check_branch
      %39 = sbr.rel (0) target = $region17
    $region16: #{tpu_custom_call.1} parent=1 // pred_region
      %s41 = ssub.s32 512, 512
      %42 = vsyncadd [#allocation8], %s41
      %s43 = sshll.u32 [#allocation9], 4
      %s44 = int_to_ptr.vmem [resolvable:$true] %s43
      %49 = dma.hbm_to_vmem [thread:$0]  %s3, 512, %s44, [#allocation8], 128, 128, 8
    $region17: #{tpu_custom_call.1} parent=1 // pred_fallthru
      _
    // Predicated region
    $region18: #{tpu_custom_call.1} parent=1 // pred_check
      _
    $region19: #{tpu_custom_call.1} parent=1 // pred_check_branch
      %51 = sbr.rel (0) target = $region21
    $region20: #{tpu_custom_call.1} parent=1 // pred_region
      %52 = dma.done [#allocation5], 256
    $region21: #{tpu_custom_call.1} parent=1 // pred_fallthru
      _
    // Predicated region
    $region22: #{tpu_custom_call.1} parent=1 // pred_check
      _
    $region23: #{tpu_custom_call.1} parent=1 // pred_check_branch
      %54 = sbr.rel (0) target = $region25
    $region24: #{tpu_custom_call.1} parent=1 // pred_region
      %55 = dma.done [#allocation8], 512
    $region25: #{tpu_custom_call.1} parent=1 // pred_fallthru
      _
    // Predicated region
    $region26: #{tpu_custom_call.1} parent=1 // pred_check
      _
    $region27: #{tpu_custom_call.1} parent=1 // pred_check_branch
      %57 = sbr.rel (0) target = $region29
    $region28: #{tpu_custom_call.1} parent=1 // pred_region
      %58 = dma.done [#allocation8], 512
    $region29: #{tpu_custom_call.1} parent=1 // pred_fallthru
      _
    %p59 = scmp.eq.s32.totalorder 0, 0
    // Predicated region
    $region30: #{tpu_custom_call.1} parent=1 // pred_check
      %p60 = pneg %p59
    $region31: #{tpu_custom_call.1} parent=1 // pred_check_branch
      %62 = sbr.rel (%p60) target = $region33
    $region32: #{tpu_custom_call.1} parent=1 // pred_region
      %vm63 = vcmask 254976
      %64 = vst.msk [vmem:[#allocation2] sm:$0x3] %vm63, 0.0
      %65 = vst.msk [vmem:[#allocation3] sm:$0x3] %vm63, 0.0
    $region33: #{tpu_custom_call.1} parent=1 // pred_fallthru
      _
    %v66 = vld [vmem:[%s1] sm:$0x3]
    %v67 = vld [vmem:[#allocation7] sm:$0xff]
    %v68 = vld [vmem:[#allocation7 + $0x8] sm:$0xff]
    %v69 = vld [vmem:[#allocation7 + $0x10] sm:$0xff]
    %v70 = vld [vmem:[#allocation7 + $0x18] sm:$0xff]
    %v71 = vld [vmem:[#allocation9] sm:$0xff]
    %v72 = vld [vmem:[#allocation9 + $0x8] sm:$0xff]
    %v73 = vld [vmem:[#allocation9 + $0x10] sm:$0xff]
    %v74 = vld [vmem:[#allocation9 + $0x18] sm:$0xff]
    %v75 = vld [vmem:[#allocation2] sm:$0x3]
    %v76 = vld [vmem:[#allocation3] sm:$0x3]
    %v77 = vld [vmem:[#allocation4] sm:$0x1]
    %v78 = vld [vmem:[#allocation4 + $0x8] sm:$0x1]
    %vm79 = vcmask 261120
    %v81 = vsel %vm79, %v75, 0
    %83 = vmatprep.subr.mxu0 0.0
    %84 = vmatpush1.msra.mxu0 %v71
    %85 = vmatprep.subr.mxu0 0.0
    %86 = vmatpush1.msra.mxu0 %v72
    %87 = vmatprep.subr.mxu0 0.0
    %88 = vmatpush1.msra.mxu0 %v73
    %89 = vmatprep.subr.mxu0 0.0
    %90 = vmatpush1.msra.mxu0 %v74
    %91 = vmatprep.subr.mxu0 0.0
    %92 = vmatpush1.msra.mxu0 0.0
    %93 = vmatprep.subr.mxu0 0.0
    %94 = vmatpush1.msra.mxu0 0.0
    %95 = vmatprep.subr.mxu0 0.0
    %96 = vmatpush1.msra.mxu0 0.0
    %97 = vmatprep.subr.mxu0 0.0
    %98 = vmatpush1.msra.mxu0 0.0
    %99 = vmatprep.subr.mxu0 0.0
    %100 = vmatpush1.msra.mxu0 0.0
    %101 = vmatprep.subr.mxu0 0.0
    %102 = vmatpush1.msra.mxu0 0.0
    %103 = vmatprep.subr.mxu0 0.0
    %104 = vmatpush1.msra.mxu0 0.0
    %105 = vmatprep.subr.mxu0 0.0
    %106 = vmatpush1.msra.mxu0 0.0
    %107 = vmatprep.subr.mxu0 0.0
    %108 = vmatpush1.msra.mxu0 0.0
    %109 = vmatprep.subr.mxu0 0.0
    %110 = vmatpush1.msra.mxu0 0.0
    %111 = vmatprep.subr.mxu0 0.0
    %112 = vmatpush1.msra.mxu0 0.0
    %113 = vmatprep.subr.mxu0 0.0
    %114 = vmatpush1.msra.mxu0 0.0
    %115 = vmatprep.subr.mxu0 0.0
    %116 = vmatpush1.msra.mxu0 0.0
    %117 = vmatprep.subr.mxu0 0.0
    %118 = vmatpush1.msra.mxu0 0.0
    %119 = vmatprep.subr.mxu0 0.0
    %120 = vmatpush1.msra.mxu0 0.0
    %121 = vmatprep.subr.mxu0 0.0
    %122 = vmatpush1.msra.mxu0 0.0
    %123 = vmatprep.subr.mxu0 0.0
    %124 = vmatpush1.msra.mxu0 0.0
    %125 = vmatprep.subr.mxu0 0.0
    %126 = vmatpush1.msra.mxu0 0.0
    %127 = vmatprep.subr.mxu0 0.0
    %128 = vmatpush1.msra.mxu0 0.0
    %129 = vmatprep.subr.mxu0 0.0
    %130 = vmatpush1.msra.mxu0 0.0
    %131 = vmatprep.subr.mxu0 0.0
    %132 = vmatpush1.msra.mxu0 0.0
    %133 = vmatprep.subr.mxu0 0.0
    %134 = vmatpush1.msra.mxu0 0.0
    %135 = vmatprep.subr.mxu0 0.0
    %136 = vmatpush1.msra.mxu0 0.0
    %137 = vmatprep.subr.mxu0 0.0
    %138 = vmatpush1.msra.mxu0 0.0
    %139 = vmatprep.subr.mxu0 0.0
    %140 = vmatpush1.msra.mxu0 0.0
    %141 = vmatprep.subr.mxu0 0.0
    %142 = vmatpush1.msra.mxu0 0.0
    %143 = vmatprep.subr.mxu0 0.0
    %144 = vmatpush1.msra.mxu0 0.0
    %145 = vmatprep.subr.mxu0 0.0
    %146 = vmatpush1.msra.mxu0 0.0
    %147 = vmatprep.mubr.f32.mxu0 0.0
    %148 = vmatmul.mubr.f32.gmra.mrb[0].mxu0 %v81
    %v149 = vpop.f32.mrb[0].mxu0
    %v150 = vadd.f32 0.0, %v149
    %v151 = vpop.f32.mrb[0].mxu0
    %152 = vdwg.mxu0
    %v155 = vrot.slane %v78, 7
    %vm156 = vcmask 1041409
    %v157 = vsel %vm156, %v155, %v77
    %v158 = vsel %vm79, %v157, 0
    %160 = vmatprep.subr.mxu0 0.0
    %161 = vmatpush1.msra.mxu0 %v67
    %162 = vmatprep.subr.mxu0 0.0
    %163 = vmatpush1.msra.mxu0 %v68
    %164 = vmatprep.subr.mxu0 0.0
    %165 = vmatpush1.msra.mxu0 %v69
    %166 = vmatprep.subr.mxu0 0.0
    %167 = vmatpush1.msra.mxu0 %v70
    %168 = vmatprep.subr.mxu0 0.0
    %169 = vmatpush1.msra.mxu0 0.0
    %170 = vmatprep.subr.mxu0 0.0
    %171 = vmatpush1.msra.mxu0 0.0
    %172 = vmatprep.subr.mxu0 0.0
    %173 = vmatpush1.msra.mxu0 0.0
    %174 = vmatprep.subr.mxu0 0.0
    %175 = vmatpush1.msra.mxu0 0.0
    %176 = vmatprep.subr.mxu0 0.0
    %177 = vmatpush1.msra.mxu0 0.0
    %178 = vmatprep.subr.mxu0 0.0
    %179 = vmatpush1.msra.mxu0 0.0
    %180 = vmatprep.subr.mxu0 0.0
    %181 = vmatpush1.msra.mxu0 0.0
    %182 = vmatprep.subr.mxu0 0.0
    %183 = vmatpush1.msra.mxu0 0.0
    %184 = vmatprep.subr.mxu0 0.0
    %185 = vmatpush1.msra.mxu0 0.0
    %186 = vmatprep.subr.mxu0 0.0
    %187 = vmatpush1.msra.mxu0 0.0
    %188 = vmatprep.subr.mxu0 0.0
    %189 = vmatpush1.msra.mxu0 0.0
    %190 = vmatprep.subr.mxu0 0.0
    %191 = vmatpush1.msra.mxu0 0.0
    %192 = vmatprep.subr.mxu0 0.0
    %193 = vmatpush1.msra.mxu0 0.0
    %194 = vmatprep.subr.mxu0 0.0
    %195 = vmatpush1.msra.mxu0 0.0
    %196 = vmatprep.subr.mxu0 0.0
    %197 = vmatpush1.msra.mxu0 0.0
    %198 = vmatprep.subr.mxu0 0.0
    %199 = vmatpush1.msra.mxu0 0.0
    %200 = vmatprep.subr.mxu0 0.0
    %201 = vmatpush1.msra.mxu0 0.0
    %202 = vmatprep.subr.mxu0 0.0
    %203 = vmatpush1.msra.mxu0 0.0
    %204 = vmatprep.subr.mxu0 0.0
    %205 = vmatpush1.msra.mxu0 0.0
    %206 = vmatprep.subr.mxu0 0.0
    %207 = vmatpush1.msra.mxu0 0.0
    %208 = vmatprep.subr.mxu0 0.0
    %209 = vmatpush1.msra.mxu0 0.0
    %210 = vmatprep.subr.mxu0 0.0
    %211 = vmatpush1.msra.mxu0 0.0
    %212 = vmatprep.subr.mxu0 0.0
    %213 = vmatpush1.msra.mxu0 0.0
    %214 = vmatprep.subr.mxu0 0.0
    %215 = vmatpush1.msra.mxu0 0.0
    %216 = vmatprep.subr.mxu0 0.0
    %217 = vmatpush1.msra.mxu0 0.0
    %218 = vmatprep.subr.mxu0 0.0
    %219 = vmatpush1.msra.mxu0 0.0
    %220 = vmatprep.subr.mxu0 0.0
    %221 = vmatpush1.msra.mxu0 0.0
    %222 = vmatprep.subr.mxu0 0.0
    %223 = vmatpush1.msra.mxu0 0.0
    %224 = vmatprep.mubr.f32.mxu0 0.0
    %225 = vmatmul.mubr.f32.gmra.mrb[0].mxu0 %v158
    %v226 = vpop.f32.mrb[0].mxu0
    %v227 = vadd.f32 %v150, %v226
    %v228 = vpop.f32.mrb[0].mxu0
    %229 = vdwg.mxu0
    %v230 = vadd.f32 %v227, %v66
    %v231 = vxor.u32 %v230, 2147483648
    %v232 = vmul.f32 %v231, 1.442695
    %v233 = vpow.pop %v232
    %v234 = vadd.f32 %v233, 1.0
    %v235 = vrcp.pop %v234
    %v236 = vmul.f32 1.0, %v235
    %v237 = vtanh.pop %v230
    %239 = vrot.lane.b32.xlu0 %v76, 32
    %v240 = vpop.permute.xlu0 %239
    %v242 = vmul.f32 %v236, %v240
    %244 = vrot.lane.b32.xlu0 %v237, 64
    %v245 = vpop.permute.xlu0 %244
    %v247 = vmul.f32 %v236, %v245
    %249 = vrot.lane.b32.xlu0 %v247, 32
    %v250 = vpop.permute.xlu0 %249
    %v252 = vadd.f32 %v242, %v250
    %v253 = vtanh.pop %v252
    %255 = vrot.lane.b32.xlu0 %v253, 64
    %v256 = vpop.permute.xlu0 %255
    %v258 = vmul.f32 %v236, %v256
    %v261 = vunpack.c.l.s4 1966171168
    %v262 = vunpack.c.0.s8 %v261
    %v263 = vlaneseq
    %v264 = vshrl.u32 %v263, 7
    %v265 = vsub.s32 %v262, %v264
    %v266 = vrot.slane %v258, %v265
    %v267 = vcombine.high %v266, %v266
    %v269 = vunpack.c.l.s4 1966171168
    %v270 = vunpack.c.0.s8 %v269
    %v271 = vlaneseq
    %v272 = vshrl.u32 %v271, 7
    %v273 = vsub.s32 %v270, %v272
    %v274 = vrot.slane %v266, %v273
    %v276 = vunpack.c.l.s4 1966171168
    %v277 = vunpack.c.0.s8 %v276
    %v278 = vlaneseq
    %v279 = vshrl.u32 %v278, 7
    %v280 = vsub.s32 %v277, %v279
    %v281 = vrot.slane %v267, %v280
    %v282 = vlaneseq
    %v283 = vshrl.u32 %v282, 7
    %v284 = vsub.s32 0, %v283
    %v285 = vrot.slane %v274, %v284
    %v286 = vlaneseq
    %v287 = vshrl.u32 %v286, 7
    %v288 = vsub.s32 0, %v287
    %v289 = vrot.slane %v281, %v288
    %290 = vrot.lane.b32.xlu0 %v285, 32
    %v291 = vpop.permute.xlu0 %290
    %292 = vrot.lane.b32.xlu0 %v289, 32
    %v293 = vpop.permute.xlu0 %292
    %vm296 = vcmask 253952
    %297 = vst.msk [vmem:[#allocation10] sm:$0x1] %vm296, %v291
    %298 = vst.msk [vmem:[#allocation10 + $0x8] sm:$0x1] %vm296, %v293
    %v299 = vld [vmem:[#allocation4 + $0x1] sm:$0x1]
    %v300 = vld [vmem:[#allocation4 + $0x9] sm:$0x1]
    %301 = vrot.lane.b32.xlu0 %v258, 32
    %v302 = vpop.permute.xlu0 %301
    %v303 = vsel %vm79, %v302, 0
    %305 = vmatprep.subr.mxu0 0.0
    %306 = vmatpush1.msra.mxu0 %v71
    %307 = vmatprep.subr.mxu0 0.0
    %308 = vmatpush1.msra.mxu0 %v72
    %309 = vmatprep.subr.mxu0 0.0
    %310 = vmatpush1.msra.mxu0 %v73
    %311 = vmatprep.subr.mxu0 0.0
    %312 = vmatpush1.msra.mxu0 %v74
    %313 = vmatprep.subr.mxu0 0.0
    %314 = vmatpush1.msra.mxu0 0.0
    %315 = vmatprep.subr.mxu0 0.0
    %316 = vmatpush1.msra.mxu0 0.0
    %317 = vmatprep.subr.mxu0 0.0
    %318 = vmatpush1.msra.mxu0 0.0
    %319 = vmatprep.subr.mxu0 0.0
    %320 = vmatpush1.msra.mxu0 0.0
    %321 = vmatprep.subr.mxu0 0.0
    %322 = vmatpush1.msra.mxu0 0.0
    %323 = vmatprep.subr.mxu0 0.0
    %324 = vmatpush1.msra.mxu0 0.0
    %325 = vmatprep.subr.mxu0 0.0
    %326 = vmatpush1.msra.mxu0 0.0
    %327 = vmatprep.subr.mxu0 0.0
    %328 = vmatpush1.msra.mxu0 0.0
    %329 = vmatprep.subr.mxu0 0.0
    %330 = vmatpush1.msra.mxu0 0.0
    %331 = vmatprep.subr.mxu0 0.0
    %332 = vmatpush1.msra.mxu0 0.0
    %333 = vmatprep.subr.mxu0 0.0
    %334 = vmatpush1.msra.mxu0 0.0
    %335 = vmatprep.subr.mxu0 0.0
    %336 = vmatpush1.msra.mxu0 0.0
    %337 = vmatprep.subr.mxu0 0.0
    %338 = vmatpush1.msra.mxu0 0.0
    %339 = vmatprep.subr.mxu0 0.0
    %340 = vmatpush1.msra.mxu0 0.0
    %341 = vmatprep.subr.mxu0 0.0
    %342 = vmatpush1.msra.mxu0 0.0
    %343 = vmatprep.subr.mxu0 0.0
    %344 = vmatpush1.msra.mxu0 0.0
    %345 = vmatprep.subr.mxu0 0.0
    %346 = vmatpush1.msra.mxu0 0.0
    %347 = vmatprep.subr.mxu0 0.0
    %348 = vmatpush1.msra.mxu0 0.0
    %349 = vmatprep.subr.mxu0 0.0
    %350 = vmatpush1.msra.mxu0 0.0
    %351 = vmatprep.subr.mxu0 0.0
    %352 = vmatpush1.msra.mxu0 0.0
    %353 = vmatprep.subr.mxu0 0.0
    %354 = vmatpush1.msra.mxu0 0.0
    %355 = vmatprep.subr.mxu0 0.0
    %356 = vmatpush1.msra.mxu0 0.0
    %357 = vmatprep.subr.mxu0 0.0
    %358 = vmatpush1.msra.mxu0 0.0
    %359 = vmatprep.subr.mxu0 0.0
    %360 = vmatpush1.msra.mxu0 0.0
    %361 = vmatprep.subr.mxu0 0.0
    %362 = vmatpush1.msra.mxu0 0.0
    %363 = vmatprep.subr.mxu0 0.0
    %364 = vmatpush1.msra.mxu0 0.0
    %365 = vmatprep.subr.mxu0 0.0
    %366 = vmatpush1.msra.mxu0 0.0
    %367 = vmatprep.subr.mxu0 0.0
    %368 = vmatpush1.msra.mxu0 0.0
    %369 = vmatprep.mubr.f32.mxu0 0.0
    %370 = vmatmul.mubr.f32.gmra.mrb[0].mxu0 %v303
    %v371 = vpop.f32.mrb[0].mxu0
    %v372 = vadd.f32 0.0, %v371
    %v373 = vpop.f32.mrb[0].mxu0
    %374 = vdwg.mxu0
    %v377 = vrot.slane %v300, 7
    %v378 = vsel %vm156, %v377, %v299
    %v379 = vsel %vm79, %v378, 0
    %381 = vmatprep.subr.mxu0 0.0
    %382 = vmatpush1.msra.mxu0 %v67
    %383 = vmatprep.subr.mxu0 0.0
    %384 = vmatpush1.msra.mxu0 %v68
    %385 = vmatprep.subr.mxu0 0.0
    %386 = vmatpush1.msra.mxu0 %v69
    %387 = vmatprep.subr.mxu0 0.0
    %388 = vmatpush1.msra.mxu0 %v70
    %389 = vmatprep.subr.mxu0 0.0
    %390 = vmatpush1.msra.mxu0 0.0
    %391 = vmatprep.subr.mxu0 0.0
    %392 = vmatpush1.msra.mxu0 0.0
    %393 = vmatprep.subr.mxu0 0.0
    %394 = vmatpush1.msra.mxu0 0.0
    %395 = vmatprep.subr.mxu0 0.0
    %396 = vmatpush1.msra.mxu0 0.0
    %397 = vmatprep.subr.mxu0 0.0
    %398 = vmatpush1.msra.mxu0 0.0
    %399 = vmatprep.subr.mxu0 0.0
    %400 = vmatpush1.msra.mxu0 0.0
    %401 = vmatprep.subr.mxu0 0.0
    %402 = vmatpush1.msra.mxu0 0.0
    %403 = vmatprep.subr.mxu0 0.0
    %404 = vmatpush1.msra.mxu0 0.0
    %405 = vmatprep.subr.mxu0 0.0
    %406 = vmatpush1.msra.mxu0 0.0
    %407 = vmatprep.subr.mxu0 0.0
    %408 = vmatpush1.msra.mxu0 0.0
    %409 = vmatprep.subr.mxu0 0.0
    %410 = vmatpush1.msra.mxu0 0.0
    %411 = vmatprep.subr.mxu0 0.0
    %412 = vmatpush1.msra.mxu0 0.0
    %413 = vmatprep.subr.mxu0 0.0
    %414 = vmatpush1.msra.mxu0 0.0
    %415 = vmatprep.subr.mxu0 0.0
    %416 = vmatpush1.msra.mxu0 0.0
    %417 = vmatprep.subr.mxu0 0.0
    %418 = vmatpush1.msra.mxu0 0.0
    %419 = vmatprep.subr.mxu0 0.0
    %420 = vmatpush1.msra.mxu0 0.0
    %421 = vmatprep.subr.mxu0 0.0
    %422 = vmatpush1.msra.mxu0 0.0
    %423 = vmatprep.subr.mxu0 0.0
    %424 = vmatpush1.msra.mxu0 0.0
    %425 = vmatprep.subr.mxu0 0.0
    %426 = vmatpush1.msra.mxu0 0.0
    %427 = vmatprep.subr.mxu0 0.0
    %428 = vmatpush1.msra.mxu0 0.0
    %429 = vmatprep.subr.mxu0 0.0
    %430 = vmatpush1.msra.mxu0 0.0
    %431 = vmatprep.subr.mxu0 0.0
    %432 = vmatpush1.msra.mxu0 0.0
    %433 = vmatprep.subr.mxu0 0.0
    %434 = vmatpush1.msra.mxu0 0.0
    %435 = vmatprep.subr.mxu0 0.0
    %436 = vmatpush1.msra.mxu0 0.0
    %437 = vmatprep.subr.mxu0 0.0
    %438 = vmatpush1.msra.mxu0 0.0
    %439 = vmatprep.subr.mxu0 0.0
    %440 = vmatpush1.msra.mxu0 0.0
    %441 = vmatprep.subr.mxu0 0.0
    %442 = vmatpush1.msra.mxu0 0.0
    %443 = vmatprep.subr.mxu0 0.0
    %444 = vmatpush1.msra.mxu0 0.0
    %445 = vmatprep.mubr.f32.mxu0 0.0
    %446 = vmatmul.mubr.f32.gmra.mrb[0].mxu0 %v379
    %v447 = vpop.f32.mrb[0].mxu0
    %v448 = vadd.f32 %v372, %v447
    %v449 = vpop.f32.mrb[0].mxu0
    %450 = vdwg.mxu0
    %v451 = vadd.f32 %v448, %v66
    %v452 = vxor.u32 %v451, 2147483648
    %v453 = vmul.f32 %v452, 1.442695
    %v454 = vpow.pop %v453
    %v455 = vadd.f32 %v454, 1.0
    %v456 = vrcp.pop %v455
    %v457 = vmul.f32 1.0, %v456
    %v458 = vtanh.pop %v451
    %v459 = vmul.f32 %v457, %v252
    %461 = vrot.lane.b32.xlu0 %v458, 64
    %v462 = vpop.permute.xlu0 %461
    %v464 = vmul.f32 %v457, %v462
    %466 = vrot.lane.b32.xlu0 %v464, 32
    %v467 = vpop.permute.xlu0 %466
    %v469 = vadd.f32 %v459, %v467
    %v470 = vtanh.pop %v469
    %472 = vrot.lane.b32.xlu0 %v470, 64
    %v473 = vpop.permute.xlu0 %472
    %v475 = vmul.f32 %v457, %v473
    %v478 = vunpack.c.l.s4 1966171168
    %v479 = vunpack.c.0.s8 %v478
    %v480 = vlaneseq
    %v481 = vshrl.u32 %v480, 7
    %v482 = vsub.s32 %v479, %v481
    %v483 = vrot.slane %v475, %v482
    %v484 = vcombine.high %v483, %v483
    %v486 = vunpack.c.l.s4 1966171168
    %v487 = vunpack.c.0.s8 %v486
    %v488 = vlaneseq
    %v489 = vshrl.u32 %v488, 7
    %v490 = vsub.s32 %v487, %v489
    %v491 = vrot.slane %v483, %v490
    %v493 = vunpack.c.l.s4 1966171168
    %v494 = vunpack.c.0.s8 %v493
    %v495 = vlaneseq
    %v496 = vshrl.u32 %v495, 7
    %v497 = vsub.s32 %v494, %v496
    %v498 = vrot.slane %v484, %v497
    %v499 = vlaneseq
    %v500 = vshrl.u32 %v499, 7
    %v501 = vsub.s32 0, %v500
    %v502 = vrot.slane %v491, %v501
    %v503 = vlaneseq
    %v504 = vshrl.u32 %v503, 7
    %v505 = vsub.s32 0, %v504
    %v506 = vrot.slane %v498, %v505
    %507 = vrot.lane.b32.xlu0 %v502, 32
    %v508 = vpop.permute.xlu0 %507
    %509 = vrot.lane.b32.xlu0 %v506, 32
    %v510 = vpop.permute.xlu0 %509
    %513 = vst.msk [vmem:[#allocation10 + $0x1] sm:$0x1] %vm296, %v508
    %514 = vst.msk [vmem:[#allocation10 + $0x9] sm:$0x1] %vm296, %v510
    %v515 = vld [vmem:[#allocation4 + $0x2] sm:$0x1]
    %v516 = vld [vmem:[#allocation4 + $0xa] sm:$0x1]
    %517 = vrot.lane.b32.xlu0 %v475, 32
    %v518 = vpop.permute.xlu0 %517
    %v519 = vsel %vm79, %v518, 0
    %521 = vmatprep.subr.mxu0 0.0
    %522 = vmatpush1.msra.mxu0 %v71
    %523 = vmatprep.subr.mxu0 0.0
    %524 = vmatpush1.msra.mxu0 %v72
    %525 = vmatprep.subr.mxu0 0.0
    %526 = vmatpush1.msra.mxu0 %v73
    %527 = vmatprep.subr.mxu0 0.0
    %528 = vmatpush1.msra.mxu0 %v74
    %529 = vmatprep.subr.mxu0 0.0
    %530 = vmatpush1.msra.mxu0 0.0
    %531 = vmatprep.subr.mxu0 0.0
    %532 = vmatpush1.msra.mxu0 0.0
    %533 = vmatprep.subr.mxu0 0.0
    %534 = vmatpush1.msra.mxu0 0.0
    %535 = vmatprep.subr.mxu0 0.0
    %536 = vmatpush1.msra.mxu0 0.0
    %537 = vmatprep.subr.mxu0 0.0
    %538 = vmatpush1.msra.mxu0 0.0
    %539 = vmatprep.subr.mxu0 0.0
    %540 = vmatpush1.msra.mxu0 0.0
    %541 = vmatprep.subr.mxu0 0.0
    %542 = vmatpush1.msra.mxu0 0.0
    %543 = vmatprep.subr.mxu0 0.0
    %544 = vmatpush1.msra.mxu0 0.0
    %545 = vmatprep.subr.mxu0 0.0
    %546 = vmatpush1.msra.mxu0 0.0
    %547 = vmatprep.subr.mxu0 0.0
    %548 = vmatpush1.msra.mxu0 0.0
    %549 = vmatprep.subr.mxu0 0.0
    %550 = vmatpush1.msra.mxu0 0.0
    %551 = vmatprep.subr.mxu0 0.0
    %552 = vmatpush1.msra.mxu0 0.0
    %553 = vmatprep.subr.mxu0 0.0
    %554 = vmatpush1.msra.mxu0 0.0
    %555 = vmatprep.subr.mxu0 0.0
    %556 = vmatpush1.msra.mxu0 0.0
    %557 = vmatprep.subr.mxu0 0.0
    %558 = vmatpush1.msra.mxu0 0.0
    %559 = vmatprep.subr.mxu0 0.0
    %560 = vmatpush1.msra.mxu0 0.0
    %561 = vmatprep.subr.mxu0 0.0
    %562 = vmatpush1.msra.mxu0 0.0
    %563 = vmatprep.subr.mxu0 0.0
    %564 = vmatpush1.msra.mxu0 0.0
    %565 = vmatprep.subr.mxu0 0.0
    %566 = vmatpush1.msra.mxu0 0.0
    %567 = vmatprep.subr.mxu0 0.0
    %568 = vmatpush1.msra.mxu0 0.0
    %569 = vmatprep.subr.mxu0 0.0
    %570 = vmatpush1.msra.mxu0 0.0
    %571 = vmatprep.subr.mxu0 0.0
    %572 = vmatpush1.msra.mxu0 0.0
    %573 = vmatprep.subr.mxu0 0.0
    %574 = vmatpush1.msra.mxu0 0.0
    %575 = vmatprep.subr.mxu0 0.0
    %576 = vmatpush1.msra.mxu0 0.0
    %577 = vmatprep.subr.mxu0 0.0
    %578 = vmatpush1.msra.mxu0 0.0
    %579 = vmatprep.subr.mxu0 0.0
    %580 = vmatpush1.msra.mxu0 0.0
    %581 = vmatprep.subr.mxu0 0.0
    %582 = vmatpush1.msra.mxu0 0.0
    %583 = vmatprep.subr.mxu0 0.0
    %584 = vmatpush1.msra.mxu0 0.0
    %585 = vmatprep.mubr.f32.mxu0 0.0
    %586 = vmatmul.mubr.f32.gmra.mrb[0].mxu0 %v519
    %v587 = vpop.f32.mrb[0].mxu0
    %v588 = vadd.f32 0.0, %v587
    %v589 = vpop.f32.mrb[0].mxu0
    %590 = vdwg.mxu0
    %v593 = vrot.slane %v516, 7
    %v594 = vsel %vm156, %v593, %v515
    %v595 = vsel %vm79, %v594, 0
    %597 = vmatprep.subr.mxu0 0.0
    %598 = vmatpush1.msra.mxu0 %v67
    %599 = vmatprep.subr.mxu0 0.0
    %600 = vmatpush1.msra.mxu0 %v68
    %601 = vmatprep.subr.mxu0 0.0
    %602 = vmatpush1.msra.mxu0 %v69
    %603 = vmatprep.subr.mxu0 0.0
    %604 = vmatpush1.msra.mxu0 %v70
    %605 = vmatprep.subr.mxu0 0.0
    %606 = vmatpush1.msra.mxu0 0.0
    %607 = vmatprep.subr.mxu0 0.0
    %608 = vmatpush1.msra.mxu0 0.0
    %609 = vmatprep.subr.mxu0 0.0
    %610 = vmatpush1.msra.mxu0 0.0
    %611 = vmatprep.subr.mxu0 0.0
    %612 = vmatpush1.msra.mxu0 0.0
    %613 = vmatprep.subr.mxu0 0.0
    %614 = vmatpush1.msra.mxu0 0.0
    %615 = vmatprep.subr.mxu0 0.0
    %616 = vmatpush1.msra.mxu0 0.0
    %617 = vmatprep.subr.mxu0 0.0
    %618 = vmatpush1.msra.mxu0 0.0
    %619 = vmatprep.subr.mxu0 0.0
    %620 = vmatpush1.msra.mxu0 0.0
    %621 = vmatprep.subr.mxu0 0.0
    %622 = vmatpush1.msra.mxu0 0.0
    %623 = vmatprep.subr.mxu0 0.0
    %624 = vmatpush1.msra.mxu0 0.0
    %625 = vmatprep.subr.mxu0 0.0
    %626 = vmatpush1.msra.mxu0 0.0
    %627 = vmatprep.subr.mxu0 0.0
    %628 = vmatpush1.msra.mxu0 0.0
    %629 = vmatprep.subr.mxu0 0.0
    %630 = vmatpush1.msra.mxu0 0.0
    %631 = vmatprep.subr.mxu0 0.0
    %632 = vmatpush1.msra.mxu0 0.0
    %633 = vmatprep.subr.mxu0 0.0
    %634 = vmatpush1.msra.mxu0 0.0
    %635 = vmatprep.subr.mxu0 0.0
    %636 = vmatpush1.msra.mxu0 0.0
    %637 = vmatprep.subr.mxu0 0.0
    %638 = vmatpush1.msra.mxu0 0.0
    %639 = vmatprep.subr.mxu0 0.0
    %640 = vmatpush1.msra.mxu0 0.0
    %641 = vmatprep.subr.mxu0 0.0
    %642 = vmatpush1.msra.mxu0 0.0
    %643 = vmatprep.subr.mxu0 0.0
    %644 = vmatpush1.msra.mxu0 0.0
    %645 = vmatprep.subr.mxu0 0.0
    %646 = vmatpush1.msra.mxu0 0.0
    %647 = vmatprep.subr.mxu0 0.0
    %648 = vmatpush1.msra.mxu0 0.0
    %649 = vmatprep.subr.mxu0 0.0
    %650 = vmatpush1.msra.mxu0 0.0
    %651 = vmatprep.subr.mxu0 0.0
    %652 = vmatpush1.msra.mxu0 0.0
    %653 = vmatprep.subr.mxu0 0.0
    %654 = vmatpush1.msra.mxu0 0.0
    %655 = vmatprep.subr.mxu0 0.0
    %656 = vmatpush1.msra.mxu0 0.0
    %657 = vmatprep.subr.mxu0 0.0
    %658 = vmatpush1.msra.mxu0 0.0
    %659 = vmatprep.subr.mxu0 0.0
    %660 = vmatpush1.msra.mxu0 0.0
    %661 = vmatprep.mubr.f32.mxu0 0.0
    %662 = vmatmul.mubr.f32.gmra.mrb[0].mxu0 %v595
    %v663 = vpop.f32.mrb[0].mxu0
    %v664 = vadd.f32 %v588, %v663
    %v665 = vpop.f32.mrb[0].mxu0
    %666 = vdwg.mxu0
    %v667 = vadd.f32 %v664, %v66
    %v668 = vxor.u32 %v667, 2147483648
    %v669 = vmul.f32 %v668, 1.442695
    %v670 = vpow.pop %v669
    %v671 = vadd.f32 %v670, 1.0
    %v672 = vrcp.pop %v671
    %v673 = vmul.f32 1.0, %v672
    %v674 = vtanh.pop %v667
    %v675 = vmul.f32 %v673, %v469
    %677 = vrot.lane.b32.xlu0 %v674, 64
    %v678 = vpop.permute.xlu0 %677
    %v680 = vmul.f32 %v673, %v678
    %682 = vrot.lane.b32.xlu0 %v680, 32
    %v683 = vpop.permute.xlu0 %682
    %v685 = vadd.f32 %v675, %v683
    %v686 = vtanh.pop %v685
    %688 = vrot.lane.b32.xlu0 %v686, 64
    %v689 = vpop.permute.xlu0 %688
    %v691 = vmul.f32 %v673, %v689
    %v694 = vunpack.c.l.s4 1966171168
    %v695 = vunpack.c.0.s8 %v694
    %v696 = vlaneseq
    %v697 = vshrl.u32 %v696, 7
    %v698 = vsub.s32 %v695, %v697
    %v699 = vrot.slane %v691, %v698
    %v700 = vcombine.high %v699, %v699
    %v702 = vunpack.c.l.s4 1966171168
    %v703 = vunpack.c.0.s8 %v702
    %v704 = vlaneseq
    %v705 = vshrl.u32 %v704, 7
    %v706 = vsub.s32 %v703, %v705
    %v707 = vrot.slane %v699, %v706
    %v709 = vunpack.c.l.s4 1966171168
    %v710 = vunpack.c.0.s8 %v709
    %v711 = vlaneseq
    %v712 = vshrl.u32 %v711, 7
    %v713 = vsub.s32 %v710, %v712
    %v714 = vrot.slane %v700, %v713
    %v715 = vlaneseq
    %v716 = vshrl.u32 %v715, 7
    %v717 = vsub.s32 0, %v716
    %v718 = vrot.slane %v707, %v717
    %v719 = vlaneseq
    %v720 = vshrl.u32 %v719, 7
    %v721 = vsub.s32 0, %v720
    %v722 = vrot.slane %v714, %v721
    %723 = vrot.lane.b32.xlu0 %v718, 32
    %v724 = vpop.permute.xlu0 %723
    %725 = vrot.lane.b32.xlu0 %v722, 32
    %v726 = vpop.permute.xlu0 %725
    %729 = vst.msk [vmem:[#allocation10 + $0x2] sm:$0x1] %vm296, %v724
    %730 = vst.msk [vmem:[#allocation10 + $0xa] sm:$0x1] %vm296, %v726
    %v731 = vld [vmem:[#allocation4 + $0x3] sm:$0x1]
    %v732 = vld [vmem:[#allocation4 + $0xb] sm:$0x1]
    %733 = vrot.lane.b32.xlu0 %v691, 32
    %v734 = vpop.permute.xlu0 %733
    %v735 = vsel %vm79, %v734, 0
    %737 = vmatprep.subr.mxu0 0.0
    %738 = vmatpush1.msra.mxu0 %v71
    %739 = vmatprep.subr.mxu0 0.0
    %740 = vmatpush1.msra.mxu0 %v72
    %741 = vmatprep.subr.mxu0 0.0
    %742 = vmatpush1.msra.mxu0 %v73
    %743 = vmatprep.subr.mxu0 0.0
    %744 = vmatpush1.msra.mxu0 %v74
    %745 = vmatprep.subr.mxu0 0.0
    %746 = vmatpush1.msra.mxu0 0.0
    %747 = vmatprep.subr.mxu0 0.0
    %748 = vmatpush1.msra.mxu0 0.0
    %749 = vmatprep.subr.mxu0 0.0
    %750 = vmatpush1.msra.mxu0 0.0
    %751 = vmatprep.subr.mxu0 0.0
    %752 = vmatpush1.msra.mxu0 0.0
    %753 = vmatprep.subr.mxu0 0.0
    %754 = vmatpush1.msra.mxu0 0.0
    %755 = vmatprep.subr.mxu0 0.0
    %756 = vmatpush1.msra.mxu0 0.0
    %757 = vmatprep.subr.mxu0 0.0
    %758 = vmatpush1.msra.mxu0 0.0
    %759 = vmatprep.subr.mxu0 0.0
    %760 = vmatpush1.msra.mxu0 0.0
    %761 = vmatprep.subr.mxu0 0.0
    %762 = vmatpush1.msra.mxu0 0.0
    %763 = vmatprep.subr.mxu0 0.0
    %764 = vmatpush1.msra.mxu0 0.0
    %765 = vmatprep.subr.mxu0 0.0
    %766 = vmatpush1.msra.mxu0 0.0
    %767 = vmatprep.subr.mxu0 0.0
    %768 = vmatpush1.msra.mxu0 0.0
    %769 = vmatprep.subr.mxu0 0.0
    %770 = vmatpush1.msra.mxu0 0.0
    %771 = vmatprep.subr.mxu0 0.0
    %772 = vmatpush1.msra.mxu0 0.0
    %773 = vmatprep.subr.mxu0 0.0
    %774 = vmatpush1.msra.mxu0 0.0
    %775 = vmatprep.subr.mxu0 0.0
    %776 = vmatpush1.msra.mxu0 0.0
    %777 = vmatprep.subr.mxu0 0.0
    %778 = vmatpush1.msra.mxu0 0.0
    %779 = vmatprep.subr.mxu0 0.0
    %780 = vmatpush1.msra.mxu0 0.0
    %781 = vmatprep.subr.mxu0 0.0
    %782 = vmatpush1.msra.mxu0 0.0
    %783 = vmatprep.subr.mxu0 0.0
    %784 = vmatpush1.msra.mxu0 0.0
    %785 = vmatprep.subr.mxu0 0.0
    %786 = vmatpush1.msra.mxu0 0.0
    %787 = vmatprep.subr.mxu0 0.0
    %788 = vmatpush1.msra.mxu0 0.0
    %789 = vmatprep.subr.mxu0 0.0
    %790 = vmatpush1.msra.mxu0 0.0
    %791 = vmatprep.subr.mxu0 0.0
    %792 = vmatpush1.msra.mxu0 0.0
    %793 = vmatprep.subr.mxu0 0.0
    %794 = vmatpush1.msra.mxu0 0.0
    %795 = vmatprep.subr.mxu0 0.0
    %796 = vmatpush1.msra.mxu0 0.0
    %797 = vmatprep.subr.mxu0 0.0
    %798 = vmatpush1.msra.mxu0 0.0
    %799 = vmatprep.subr.mxu0 0.0
    %800 = vmatpush1.msra.mxu0 0.0
    %801 = vmatprep.mubr.f32.mxu0 0.0
    %802 = vmatmul.mubr.f32.gmra.mrb[0].mxu0 %v735
    %v803 = vpop.f32.mrb[0].mxu0
    %v804 = vadd.f32 0.0, %v803
    %v805 = vpop.f32.mrb[0].mxu0
    %806 = vdwg.mxu0
    %v809 = vrot.slane %v732, 7
    %v810 = vsel %vm156, %v809, %v731
    %v811 = vsel %vm79, %v810, 0
    %813 = vmatprep.subr.mxu0 0.0
    %814 = vmatpush1.msra.mxu0 %v67
    %815 = vmatprep.subr.mxu0 0.0
    %816 = vmatpush1.msra.mxu0 %v68
    %817 = vmatprep.subr.mxu0 0.0
    %818 = vmatpush1.msra.mxu0 %v69
    %819 = vmatprep.subr.mxu0 0.0
    %820 = vmatpush1.msra.mxu0 %v70
    %821 = vmatprep.subr.mxu0 0.0
    %822 = vmatpush1.msra.mxu0 0.0
    %823 = vmatprep.subr.mxu0 0.0
    %824 = vmatpush1.msra.mxu0 0.0
    %825 = vmatprep.subr.mxu0 0.0
    %826 = vmatpush1.msra.mxu0 0.0
    %827 = vmatprep.subr.mxu0 0.0
    %828 = vmatpush1.msra.mxu0 0.0
    %829 = vmatprep.subr.mxu0 0.0
    %830 = vmatpush1.msra.mxu0 0.0
    %831 = vmatprep.subr.mxu0 0.0
    %832 = vmatpush1.msra.mxu0 0.0
    %833 = vmatprep.subr.mxu0 0.0
    %834 = vmatpush1.msra.mxu0 0.0
    %835 = vmatprep.subr.mxu0 0.0
    %836 = vmatpush1.msra.mxu0 0.0
    %837 = vmatprep.subr.mxu0 0.0
    %838 = vmatpush1.msra.mxu0 0.0
    %839 = vmatprep.subr.mxu0 0.0
    %840 = vmatpush1.msra.mxu0 0.0
    %841 = vmatprep.subr.mxu0 0.0
    %842 = vmatpush1.msra.mxu0 0.0
    %843 = vmatprep.subr.mxu0 0.0
    %844 = vmatpush1.msra.mxu0 0.0
    %845 = vmatprep.subr.mxu0 0.0
    %846 = vmatpush1.msra.mxu0 0.0
    %847 = vmatprep.subr.mxu0 0.0
    %848 = vmatpush1.msra.mxu0 0.0
    %849 = vmatprep.subr.mxu0 0.0
    %850 = vmatpush1.msra.mxu0 0.0
    %851 = vmatprep.subr.mxu0 0.0
    %852 = vmatpush1.msra.mxu0 0.0
    %853 = vmatprep.subr.mxu0 0.0
    %854 = vmatpush1.msra.mxu0 0.0
    %855 = vmatprep.subr.mxu0 0.0
    %856 = vmatpush1.msra.mxu0 0.0
    %857 = vmatprep.subr.mxu0 0.0
    %858 = vmatpush1.msra.mxu0 0.0
    %859 = vmatprep.subr.mxu0 0.0
    %860 = vmatpush1.msra.mxu0 0.0
    %861 = vmatprep.subr.mxu0 0.0
    %862 = vmatpush1.msra.mxu0 0.0
    %863 = vmatprep.subr.mxu0 0.0
    %864 = vmatpush1.msra.mxu0 0.0
    %865 = vmatprep.subr.mxu0 0.0
    %866 = vmatpush1.msra.mxu0 0.0
    %867 = vmatprep.subr.mxu0 0.0
    %868 = vmatpush1.msra.mxu0 0.0
    %869 = vmatprep.subr.mxu0 0.0
    %870 = vmatpush1.msra.mxu0 0.0
    %871 = vmatprep.subr.mxu0 0.0
    %872 = vmatpush1.msra.mxu0 0.0
    %873 = vmatprep.subr.mxu0 0.0
    %874 = vmatpush1.msra.mxu0 0.0
    %875 = vmatprep.subr.mxu0 0.0
    %876 = vmatpush1.msra.mxu0 0.0
    %877 = vmatprep.mubr.f32.mxu0 0.0
    %878 = vmatmul.mubr.f32.gmra.mrb[0].mxu0 %v811
    %v879 = vpop.f32.mrb[0].mxu0
    %v880 = vadd.f32 %v804, %v879
    %v881 = vpop.f32.mrb[0].mxu0
    %882 = vdwg.mxu0
    %v883 = vadd.f32 %v880, %v66
    %v884 = vxor.u32 %v883, 2147483648
    %v885 = vmul.f32 %v884, 1.442695
    %v886 = vpow.pop %v885
    %v887 = vadd.f32 %v886, 1.0
    %v888 = vrcp.pop %v887
    %v889 = vmul.f32 1.0, %v888
    %v890 = vtanh.pop %v883
    %v891 = vmul.f32 %v889, %v685
    %893 = vrot.lane.b32.xlu0 %v890, 64
    %v894 = vpop.permute.xlu0 %893
    %v896 = vmul.f32 %v889, %v894
    %898 = vrot.lane.b32.xlu0 %v896, 32
    %v899 = vpop.permute.xlu0 %898
    %v901 = vadd.f32 %v891, %v899
    %v902 = vtanh.pop %v901
    %904 = vrot.lane.b32.xlu0 %v902, 64
    %v905 = vpop.permute.xlu0 %904
    %v907 = vmul.f32 %v889, %v905
    %v910 = vunpack.c.l.s4 1966171168
    %v911 = vunpack.c.0.s8 %v910
    %v912 = vlaneseq
    %v913 = vshrl.u32 %v912, 7
    %v914 = vsub.s32 %v911, %v913
    %v915 = vrot.slane %v907, %v914
    %v916 = vcombine.high %v915, %v915
    %v918 = vunpack.c.l.s4 1966171168
    %v919 = vunpack.c.0.s8 %v918
    %v920 = vlaneseq
    %v921 = vshrl.u32 %v920, 7
    %v922 = vsub.s32 %v919, %v921
    %v923 = vrot.slane %v915, %v922
    %v925 = vunpack.c.l.s4 1966171168
    %v926 = vunpack.c.0.s8 %v925
    %v927 = vlaneseq
    %v928 = vshrl.u32 %v927, 7
    %v929 = vsub.s32 %v926, %v928
    %v930 = vrot.slane %v916, %v929
    %v931 = vlaneseq
    %v932 = vshrl.u32 %v931, 7
    %v933 = vsub.s32 0, %v932
    %v934 = vrot.slane %v923, %v933
    %v935 = vlaneseq
    %v936 = vshrl.u32 %v935, 7
    %v937 = vsub.s32 0, %v936
    %v938 = vrot.slane %v930, %v937
    %939 = vrot.lane.b32.xlu0 %v934, 32
    %v940 = vpop.permute.xlu0 %939
    %941 = vrot.lane.b32.xlu0 %v938, 32
    %v942 = vpop.permute.xlu0 %941
    %945 = vst.msk [vmem:[#allocation10 + $0x3] sm:$0x1] %vm296, %v940
    %946 = vst.msk [vmem:[#allocation10 + $0xb] sm:$0x1] %vm296, %v942
    %v947 = vld [vmem:[#allocation4 + $0x4] sm:$0x1]
    %v948 = vld [vmem:[#allocation4 + $0xc] sm:$0x1]
    %949 = vrot.lane.b32.xlu0 %v907, 32
    %v950 = vpop.permute.xlu0 %949
    %v951 = vsel %vm79, %v950, 0
    %953 = vmatprep.subr.mxu0 0.0
    %954 = vmatpush1.msra.mxu0 %v71
    %955 = vmatprep.subr.mxu0 0.0
    %956 = vmatpush1.msra.mxu0 %v72
    %957 = vmatprep.subr.mxu0 0.0
    %958 = vmatpush1.msra.mxu0 %v73
    %959 = vmatprep.subr.mxu0 0.0
    %960 = vmatpush1.msra.mxu0 %v74
    %961 = vmatprep.subr.mxu0 0.0
    %962 = vmatpush1.msra.mxu0 0.0
    %963 = vmatprep.subr.mxu0 0.0
    %964 = vmatpush1.msra.mxu0 0.0
    %965 = vmatprep.subr.mxu0 0.0
    %966 = vmatpush1.msra.mxu0 0.0
    %967 = vmatprep.subr.mxu0 0.0
    %968 = vmatpush1.msra.mxu0 0.0
    %969 = vmatprep.subr.mxu0 0.0
    %970 = vmatpush1.msra.mxu0 0.0
    %971 = vmatprep.subr.mxu0 0.0
    %972 = vmatpush1.msra.mxu0 0.0
    %973 = vmatprep.subr.mxu0 0.0
    %974 = vmatpush1.msra.mxu0 0.0
    %975 = vmatprep.subr.mxu0 0.0
    %976 = vmatpush1.msra.mxu0 0.0
    %977 = vmatprep.subr.mxu0 0.0
    %978 = vmatpush1.msra.mxu0 0.0
    %979 = vmatprep.subr.mxu0 0.0
    %980 = vmatpush1.msra.mxu0 0.0
    %981 = vmatprep.subr.mxu0 0.0
    %982 = vmatpush1.msra.mxu0 0.0
    %983 = vmatprep.subr.mxu0 0.0
    %984 = vmatpush1.msra.mxu0 0.0
    %985 = vmatprep.subr.mxu0 0.0
    %986 = vmatpush1.msra.mxu0 0.0
    %987 = vmatprep.subr.mxu0 0.0
    %988 = vmatpush1.msra.mxu0 0.0
    %989 = vmatprep.subr.mxu0 0.0
    %990 = vmatpush1.msra.mxu0 0.0
    %991 = vmatprep.subr.mxu0 0.0
    %992 = vmatpush1.msra.mxu0 0.0
    %993 = vmatprep.subr.mxu0 0.0
    %994 = vmatpush1.msra.mxu0 0.0
    %995 = vmatprep.subr.mxu0 0.0
    %996 = vmatpush1.msra.mxu0 0.0
    %997 = vmatprep.subr.mxu0 0.0
    %998 = vmatpush1.msra.mxu0 0.0
    %999 = vmatprep.subr.mxu0 0.0
    %1000 = vmatpush1.msra.mxu0 0.0
    %1001 = vmatprep.subr.mxu0 0.0
    %1002 = vmatpush1.msra.mxu0 0.0
    %1003 = vmatprep.subr.mxu0 0.0
    %1004 = vmatpush1.msra.mxu0 0.0
    %1005 = vmatprep.subr.mxu0 0.0
    %1006 = vmatpush1.msra.mxu0 0.0
    %1007 = vmatprep.subr.mxu0 0.0
    %1008 = vmatpush1.msra.mxu0 0.0
    %1009 = vmatprep.subr.mxu0 0.0
    %1010 = vmatpush1.msra.mxu0 0.0
    %1011 = vmatprep.subr.mxu0 0.0
    %1012 = vmatpush1.msra.mxu0 0.0
    %1013 = vmatprep.subr.mxu0 0.0
    %1014 = vmatpush1.msra.mxu0 0.0
    %1015 = vmatprep.subr.mxu0 0.0
    %1016 = vmatpush1.msra.mxu0 0.0
    %1017 = vmatprep.mubr.f32.mxu0 0.0
    %1018 = vmatmul.mubr.f32.gmra.mrb[0].mxu0 %v951
    %v1019 = vpop.f32.mrb[0].mxu0
    %v1020 = vadd.f32 0.0, %v1019
    %v1021 = vpop.f32.mrb[0].mxu0
    %1022 = vdwg.mxu0
    %v1025 = vrot.slane %v948, 7
    %v1026 = vsel %vm156, %v1025, %v947
    %v1027 = vsel %vm79, %v1026, 0
    %1029 = vmatprep.subr.mxu0 0.0
    %1030 = vmatpush1.msra.mxu0 %v67
    %1031 = vmatprep.subr.mxu0 0.0
    %1032 = vmatpush1.msra.mxu0 %v68
    %1033 = vmatprep.subr.mxu0 0.0
    %1034 = vmatpush1.msra.mxu0 %v69
    %1035 = vmatprep.subr.mxu0 0.0
    %1036 = vmatpush1.msra.mxu0 %v70
    %1037 = vmatprep.subr.mxu0 0.0
    %1038 = vmatpush1.msra.mxu0 0.0
    %1039 = vmatprep.subr.mxu0 0.0
    %1040 = vmatpush1.msra.mxu0 0.0
    %1041 = vmatprep.subr.mxu0 0.0
    %1042 = vmatpush1.msra.mxu0 0.0
    %1043 = vmatprep.subr.mxu0 0.0
    %1044 = vmatpush1.msra.mxu0 0.0
    %1045 = vmatprep.subr.mxu0 0.0
    %1046 = vmatpush1.msra.mxu0 0.0
    %1047 = vmatprep.subr.mxu0 0.0
    %1048 = vmatpush1.msra.mxu0 0.0
    %1049 = vmatprep.subr.mxu0 0.0
    %1050 = vmatpush1.msra.mxu0 0.0
    %1051 = vmatprep.subr.mxu0 0.0
    %1052 = vmatpush1.msra.mxu0 0.0
    %1053 = vmatprep.subr.mxu0 0.0
    %1054 = vmatpush1.msra.mxu0 0.0
    %1055 = vmatprep.subr.mxu0 0.0
    %1056 = vmatpush1.msra.mxu0 0.0
    %1057 = vmatprep.subr.mxu0 0.0
    %1058 = vmatpush1.msra.mxu0 0.0
    %1059 = vmatprep.subr.mxu0 0.0
    %1060 = vmatpush1.msra.mxu0 0.0
    %1061 = vmatprep.subr.mxu0 0.0
    %1062 = vmatpush1.msra.mxu0 0.0
    %1063 = vmatprep.subr.mxu0 0.0
    %1064 = vmatpush1.msra.mxu0 0.0
    %1065 = vmatprep.subr.mxu0 0.0
    %1066 = vmatpush1.msra.mxu0 0.0
    %1067 = vmatprep.subr.mxu0 0.0
    %1068 = vmatpush1.msra.mxu0 0.0
    %1069 = vmatprep.subr.mxu0 0.0
    %1070 = vmatpush1.msra.mxu0 0.0
    %1071 = vmatprep.subr.mxu0 0.0
    %1072 = vmatpush1.msra.mxu0 0.0
    %1073 = vmatprep.subr.mxu0 0.0
    %1074 = vmatpush1.msra.mxu0 0.0
    %1075 = vmatprep.subr.mxu0 0.0
    %1076 = vmatpush1.msra.mxu0 0.0
    %1077 = vmatprep.subr.mxu0 0.0
    %1078 = vmatpush1.msra.mxu0 0.0
    %1079 = vmatprep.subr.mxu0 0.0
    %1080 = vmatpush1.msra.mxu0 0.0
    %1081 = vmatprep.subr.mxu0 0.0
    %1082 = vmatpush1.msra.mxu0 0.0
    %1083 = vmatprep.subr.mxu0 0.0
    %1084 = vmatpush1.msra.mxu0 0.0
    %1085 = vmatprep.subr.mxu0 0.0
    %1086 = vmatpush1.msra.mxu0 0.0
    %1087 = vmatprep.subr.mxu0 0.0
    %1088 = vmatpush1.msra.mxu0 0.0
    %1089 = vmatprep.subr.mxu0 0.0
    %1090 = vmatpush1.msra.mxu0 0.0
    %1091 = vmatprep.subr.mxu0 0.0
    %1092 = vmatpush1.msra.mxu0 0.0
    %1093 = vmatprep.mubr.f32.mxu0 0.0
    %1094 = vmatmul.mubr.f32.gmra.mrb[0].mxu0 %v1027
    %v1095 = vpop.f32.mrb[0].mxu0
    %v1096 = vadd.f32 %v1020, %v1095
    %v1097 = vpop.f32.mrb[0].mxu0
    %1098 = vdwg.mxu0
    %v1099 = vadd.f32 %v1096, %v66
    %v1100 = vxor.u32 %v1099, 2147483648
    %v1101 = vmul.f32 %v1100, 1.442695
    %v1102 = vpow.pop %v1101
    %v1103 = vadd.f32 %v1102, 1.0
    %v1104 = vrcp.pop %v1103
    %v1105 = vmul.f32 1.0, %v1104
    %v1106 = vtanh.pop %v1099
    %v1107 = vmul.f32 %v1105, %v901
    %1109 = vrot.lane.b32.xlu0 %v1106, 64
    %v1110 = vpop.permute.xlu0 %1109
    %v1112 = vmul.f32 %v1105, %v1110
    %1114 = vrot.lane.b32.xlu0 %v1112, 32
    %v1115 = vpop.permute.xlu0 %1114
    %v1117 = vadd.f32 %v1107, %v1115
    %v1118 = vtanh.pop %v1117
    %1120 = vrot.lane.b32.xlu0 %v1118, 64
    %v1121 = vpop.permute.xlu0 %1120
    %v1123 = vmul.f32 %v1105, %v1121
    %v1126 = vunpack.c.l.s4 1966171168
    %v1127 = vunpack.c.0.s8 %v1126
    %v1128 = vlaneseq
    %v1129 = vshrl.u32 %v1128, 7
    %v1130 = vsub.s32 %v1127, %v1129
    %v1131 = vrot.slane %v1123, %v1130
    %v1132 = vcombine.high %v1131, %v1131
    %v1134 = vunpack.c.l.s4 1966171168
    %v1135 = vunpack.c.0.s8 %v1134
    %v1136 = vlaneseq
    %v1137 = vshrl.u32 %v1136, 7
    %v1138 = vsub.s32 %v1135, %v1137
    %v1139 = vrot.slane %v1131, %v1138
    %v1141 = vunpack.c.l.s4 1966171168
    %v1142 = vunpack.c.0.s8 %v1141
    %v1143 = vlaneseq
    %v1144 = vshrl.u32 %v1143, 7
    %v1145 = vsub.s32 %v1142, %v1144
    %v1146 = vrot.slane %v1132, %v1145
    %v1147 = vlaneseq
    %v1148 = vshrl.u32 %v1147, 7
    %v1149 = vsub.s32 0, %v1148
    %v1150 = vrot.slane %v1139, %v1149
    %v1151 = vlaneseq
    %v1152 = vshrl.u32 %v1151, 7
    %v1153 = vsub.s32 0, %v1152
    %v1154 = vrot.slane %v1146, %v1153
    %1155 = vrot.lane.b32.xlu0 %v1150, 32
    %v1156 = vpop.permute.xlu0 %1155
    %1157 = vrot.lane.b32.xlu0 %v1154, 32
    %v1158 = vpop.permute.xlu0 %1157
    %1161 = vst.msk [vmem:[#allocation10 + $0x4] sm:$0x1] %vm296, %v1156
    %1162 = vst.msk [vmem:[#allocation10 + $0xc] sm:$0x1] %vm296, %v1158
    %v1163 = vld [vmem:[#allocation4 + $0x5] sm:$0x1]
    %v1164 = vld [vmem:[#allocation4 + $0xd] sm:$0x1]
    %1165 = vrot.lane.b32.xlu0 %v1123, 32
    %v1166 = vpop.permute.xlu0 %1165
    %v1167 = vsel %vm79, %v1166, 0
    %1169 = vmatprep.subr.mxu0 0.0
    %1170 = vmatpush1.msra.mxu0 %v71
    %1171 = vmatprep.subr.mxu0 0.0
    %1172 = vmatpush1.msra.mxu0 %v72
    %1173 = vmatprep.subr.mxu0 0.0
    %1174 = vmatpush1.msra.mxu0 %v73
    %1175 = vmatprep.subr.mxu0 0.0
    %1176 = vmatpush1.msra.mxu0 %v74
    %1177 = vmatprep.subr.mxu0 0.0
    %1178 = vmatpush1.msra.mxu0 0.0
    %1179 = vmatprep.subr.mxu0 0.0
    %1180 = vmatpush1.msra.mxu0 0.0
    %1181 = vmatprep.subr.mxu0 0.0
    %1182 = vmatpush1.msra.mxu0 0.0
    %1183 = vmatprep.subr.mxu0 0.0
    %1184 = vmatpush1.msra.mxu0 0.0
    %1185 = vmatprep.subr.mxu0 0.0
    %1186 = vmatpush1.msra.mxu0 0.0
    %1187 = vmatprep.subr.mxu0 0.0
    %1188 = vmatpush1.msra.mxu0 0.0
    %1189 = vmatprep.subr.mxu0 0.0
    %1190 = vmatpush1.msra.mxu0 0.0
    %1191 = vmatprep.subr.mxu0 0.0
    %1192 = vmatpush1.msra.mxu0 0.0
    %1193 = vmatprep.subr.mxu0 0.0
    %1194 = vmatpush1.msra.mxu0 0.0
    %1195 = vmatprep.subr.mxu0 0.0
    %1196 = vmatpush1.msra.mxu0 0.0
    %1197 = vmatprep.subr.mxu0 0.0
    %1198 = vmatpush1.msra.mxu0 0.0
    %1199 = vmatprep.subr.mxu0 0.0
    %1200 = vmatpush1.msra.mxu0 0.0
    %1201 = vmatprep.subr.mxu0 0.0
    %1202 = vmatpush1.msra.mxu0 0.0
    %1203 = vmatprep.subr.mxu0 0.0
    %1204 = vmatpush1.msra.mxu0 0.0
    %1205 = vmatprep.subr.mxu0 0.0
    %1206 = vmatpush1.msra.mxu0 0.0
    %1207 = vmatprep.subr.mxu0 0.0
    %1208 = vmatpush1.msra.mxu0 0.0
    %1209 = vmatprep.subr.mxu0 0.0
    %1210 = vmatpush1.msra.mxu0 0.0
    %1211 = vmatprep.subr.mxu0 0.0
    %1212 = vmatpush1.msra.mxu0 0.0
    %1213 = vmatprep.subr.mxu0 0.0
    %1214 = vmatpush1.msra.mxu0 0.0
    %1215 = vmatprep.subr.mxu0 0.0
    %1216 = vmatpush1.msra.mxu0 0.0
    %1217 = vmatprep.subr.mxu0 0.0
    %1218 = vmatpush1.msra.mxu0 0.0
    %1219 = vmatprep.subr.mxu0 0.0
    %1220 = vmatpush1.msra.mxu0 0.0
    %1221 = vmatprep.subr.mxu0 0.0
    %1222 = vmatpush1.msra.mxu0 0.0
    %1223 = vmatprep.subr.mxu0 0.0
    %1224 = vmatpush1.msra.mxu0 0.0
    %1225 = vmatprep.subr.mxu0 0.0
    %1226 = vmatpush1.msra.mxu0 0.0
    %1227 = vmatprep.subr.mxu0 0.0
    %1228 = vmatpush1.msra.mxu0 0.0
    %1229 = vmatprep.subr.mxu0 0.0
    %1230 = vmatpush1.msra.mxu0 0.0
    %1231 = vmatprep.subr.mxu0 0.0
    %1232 = vmatpush1.msra.mxu0 0.0
    %1233 = vmatprep.mubr.f32.mxu0 0.0
    %1234 = vmatmul.mubr.f32.gmra.mrb[0].mxu0 %v1167
    %v1235 = vpop.f32.mrb[0].mxu0
    %v1236 = vadd.f32 0.0, %v1235
    %v1237 = vpop.f32.mrb[0].mxu0
    %1238 = vdwg.mxu0
    %v1241 = vrot.slane %v1164, 7
    %v1242 = vsel %vm156, %v1241, %v1163
    %v1243 = vsel %vm79, %v1242, 0
    %1245 = vmatprep.subr.mxu0 0.0
    %1246 = vmatpush1.msra.mxu0 %v67
    %1247 = vmatprep.subr.mxu0 0.0
    %1248 = vmatpush1.msra.mxu0 %v68
    %1249 = vmatprep.subr.mxu0 0.0
    %1250 = vmatpush1.msra.mxu0 %v69
    %1251 = vmatprep.subr.mxu0 0.0
    %1252 = vmatpush1.msra.mxu0 %v70
    %1253 = vmatprep.subr.mxu0 0.0
    %1254 = vmatpush1.msra.mxu0 0.0
    %1255 = vmatprep.subr.mxu0 0.0
    %1256 = vmatpush1.msra.mxu0 0.0
    %1257 = vmatprep.subr.mxu0 0.0
    %1258 = vmatpush1.msra.mxu0 0.0
    %1259 = vmatprep.subr.mxu0 0.0
    %1260 = vmatpush1.msra.mxu0 0.0
    %1261 = vmatprep.subr.mxu0 0.0
    %1262 = vmatpush1.msra.mxu0 0.0
    %1263 = vmatprep.subr.mxu0 0.0
    %1264 = vmatpush1.msra.mxu0 0.0
    %1265 = vmatprep.subr.mxu0 0.0
    %1266 = vmatpush1.msra.mxu0 0.0
    %1267 = vmatprep.subr.mxu0 0.0
    %1268 = vmatpush1.msra.mxu0 0.0
    %1269 = vmatprep.subr.mxu0 0.0
    %1270 = vmatpush1.msra.mxu0 0.0
    %1271 = vmatprep.subr.mxu0 0.0
    %1272 = vmatpush1.msra.mxu0 0.0
    %1273 = vmatprep.subr.mxu0 0.0
    %1274 = vmatpush1.msra.mxu0 0.0
    %1275 = vmatprep.subr.mxu0 0.0
    %1276 = vmatpush1.msra.mxu0 0.0
    %1277 = vmatprep.subr.mxu0 0.0
    %1278 = vmatpush1.msra.mxu0 0.0
    %1279 = vmatprep.subr.mxu0 0.0
    %1280 = vmatpush1.msra.mxu0 0.0
    %1281 = vmatprep.subr.mxu0 0.0
    %1282 = vmatpush1.msra.mxu0 0.0
    %1283 = vmatprep.subr.mxu0 0.0
    %1284 = vmatpush1.msra.mxu0 0.0
    %1285 = vmatprep.subr.mxu0 0.0
    %1286 = vmatpush1.msra.mxu0 0.0
    %1287 = vmatprep.subr.mxu0 0.0
    %1288 = vmatpush1.msra.mxu0 0.0
    %1289 = vmatprep.subr.mxu0 0.0
    %1290 = vmatpush1.msra.mxu0 0.0
    %1291 = vmatprep.subr.mxu0 0.0
    %1292 = vmatpush1.msra.mxu0 0.0
    %1293 = vmatprep.subr.mxu0 0.0
    %1294 = vmatpush1.msra.mxu0 0.0
    %1295 = vmatprep.subr.mxu0 0.0
    %1296 = vmatpush1.msra.mxu0 0.0
    %1297 = vmatprep.subr.mxu0 0.0
    %1298 = vmatpush1.msra.mxu0 0.0
    %1299 = vmatprep.subr.mxu0 0.0
    %1300 = vmatpush1.msra.mxu0 0.0
    %1301 = vmatprep.subr.mxu0 0.0
    %1302 = vmatpush1.msra.mxu0 0.0
    %1303 = vmatprep.subr.mxu0 0.0
    %1304 = vmatpush1.msra.mxu0 0.0
    %1305 = vmatprep.subr.mxu0 0.0
    %1306 = vmatpush1.msra.mxu0 0.0
    %1307 = vmatprep.subr.mxu0 0.0
    %1308 = vmatpush1.msra.mxu0 0.0
    %1309 = vmatprep.mubr.f32.mxu0 0.0
    %1310 = vmatmul.mubr.f32.gmra.mrb[0].mxu0 %v1243
    %v1311 = vpop.f32.mrb[0].mxu0
    %v1312 = vadd.f32 %v1236, %v1311
    %v1313 = vpop.f32.mrb[0].mxu0
    %1314 = vdwg.mxu0
    %v1315 = vadd.f32 %v1312, %v66
    %v1316 = vxor.u32 %v1315, 2147483648
    %v1317 = vmul.f32 %v1316, 1.442695
    %v1318 = vpow.pop %v1317
    %v1319 = vadd.f32 %v1318, 1.0
    %v1320 = vrcp.pop %v1319
    %v1321 = vmul.f32 1.0, %v1320
    %v1322 = vtanh.pop %v1315
    %v1323 = vmul.f32 %v1321, %v1117
    %1325 = vrot.lane.b32.xlu0 %v1322, 64
    %v1326 = vpop.permute.xlu0 %1325
    %v1328 = vmul.f32 %v1321, %v1326
    %1330 = vrot.lane.b32.xlu0 %v1328, 32
    %v1331 = vpop.permute.xlu0 %1330
    %v1333 = vadd.f32 %v1323, %v1331
    %v1334 = vtanh.pop %v1333
    %1336 = vrot.lane.b32.xlu0 %v1334, 64
    %v1337 = vpop.permute.xlu0 %1336
    %v1339 = vmul.f32 %v1321, %v1337
    %v1342 = vunpack.c.l.s4 1966171168
    %v1343 = vunpack.c.0.s8 %v1342
    %v1344 = vlaneseq
    %v1345 = vshrl.u32 %v1344, 7
    %v1346 = vsub.s32 %v1343, %v1345
    %v1347 = vrot.slane %v1339, %v1346
    %v1348 = vcombine.high %v1347, %v1347
    %v1350 = vunpack.c.l.s4 1966171168
    %v1351 = vunpack.c.0.s8 %v1350
    %v1352 = vlaneseq
    %v1353 = vshrl.u32 %v1352, 7
    %v1354 = vsub.s32 %v1351, %v1353
    %v1355 = vrot.slane %v1347, %v1354
    %v1357 = vunpack.c.l.s4 1966171168
    %v1358 = vunpack.c.0.s8 %v1357
    %v1359 = vlaneseq
    %v1360 = vshrl.u32 %v1359, 7
    %v1361 = vsub.s32 %v1358, %v1360
    %v1362 = vrot.slane %v1348, %v1361
    %v1363 = vlaneseq
    %v1364 = vshrl.u32 %v1363, 7
    %v1365 = vsub.s32 0, %v1364
    %v1366 = vrot.slane %v1355, %v1365
    %v1367 = vlaneseq
    %v1368 = vshrl.u32 %v1367, 7
    %v1369 = vsub.s32 0, %v1368
    %v1370 = vrot.slane %v1362, %v1369
    %1371 = vrot.lane.b32.xlu0 %v1366, 32
    %v1372 = vpop.permute.xlu0 %1371
    %1373 = vrot.lane.b32.xlu0 %v1370, 32
    %v1374 = vpop.permute.xlu0 %1373
    %1377 = vst.msk [vmem:[#allocation10 + $0x5] sm:$0x1] %vm296, %v1372
    %1378 = vst.msk [vmem:[#allocation10 + $0xd] sm:$0x1] %vm296, %v1374
    %v1379 = vld [vmem:[#allocation4 + $0x6] sm:$0x1]
    %v1380 = vld [vmem:[#allocation4 + $0xe] sm:$0x1]
    %1381 = vrot.lane.b32.xlu0 %v1339, 32
    %v1382 = vpop.permute.xlu0 %1381
    %v1383 = vsel %vm79, %v1382, 0
    %1385 = vmatprep.subr.mxu0 0.0
    %1386 = vmatpush1.msra.mxu0 %v71
    %1387 = vmatprep.subr.mxu0 0.0
    %1388 = vmatpush1.msra.mxu0 %v72
    %1389 = vmatprep.subr.mxu0 0.0
    %1390 = vmatpush1.msra.mxu0 %v73
    %1391 = vmatprep.subr.mxu0 0.0
    %1392 = vmatpush1.msra.mxu0 %v74
    %1393 = vmatprep.subr.mxu0 0.0
    %1394 = vmatpush1.msra.mxu0 0.0
    %1395 = vmatprep.subr.mxu0 0.0
    %1396 = vmatpush1.msra.mxu0 0.0
    %1397 = vmatprep.subr.mxu0 0.0
    %1398 = vmatpush1.msra.mxu0 0.0
    %1399 = vmatprep.subr.mxu0 0.0
    %1400 = vmatpush1.msra.mxu0 0.0
    %1401 = vmatprep.subr.mxu0 0.0
    %1402 = vmatpush1.msra.mxu0 0.0
    %1403 = vmatprep.subr.mxu0 0.0
    %1404 = vmatpush1.msra.mxu0 0.0
    %1405 = vmatprep.subr.mxu0 0.0
    %1406 = vmatpush1.msra.mxu0 0.0
    %1407 = vmatprep.subr.mxu0 0.0
    %1408 = vmatpush1.msra.mxu0 0.0
    %1409 = vmatprep.subr.mxu0 0.0
    %1410 = vmatpush1.msra.mxu0 0.0
    %1411 = vmatprep.subr.mxu0 0.0
    %1412 = vmatpush1.msra.mxu0 0.0
    %1413 = vmatprep.subr.mxu0 0.0
    %1414 = vmatpush1.msra.mxu0 0.0
    %1415 = vmatprep.subr.mxu0 0.0
    %1416 = vmatpush1.msra.mxu0 0.0
    %1417 = vmatprep.subr.mxu0 0.0
    %1418 = vmatpush1.msra.mxu0 0.0
    %1419 = vmatprep.subr.mxu0 0.0
    %1420 = vmatpush1.msra.mxu0 0.0
    %1421 = vmatprep.subr.mxu0 0.0
    %1422 = vmatpush1.msra.mxu0 0.0
    %1423 = vmatprep.subr.mxu0 0.0
    %1424 = vmatpush1.msra.mxu0 0.0
    %1425 = vmatprep.subr.mxu0 0.0
    %1426 = vmatpush1.msra.mxu0 0.0
    %1427 = vmatprep.subr.mxu0 0.0
    %1428 = vmatpush1.msra.mxu0 0.0
    %1429 = vmatprep.subr.mxu0 0.0
    %1430 = vmatpush1.msra.mxu0 0.0
    %1431 = vmatprep.subr.mxu0 0.0
    %1432 = vmatpush1.msra.mxu0 0.0
    %1433 = vmatprep.subr.mxu0 0.0
    %1434 = vmatpush1.msra.mxu0 0.0
    %1435 = vmatprep.subr.mxu0 0.0
    %1436 = vmatpush1.msra.mxu0 0.0
    %1437 = vmatprep.subr.mxu0 0.0
    %1438 = vmatpush1.msra.mxu0 0.0
    %1439 = vmatprep.subr.mxu0 0.0
    %1440 = vmatpush1.msra.mxu0 0.0
    %1441 = vmatprep.subr.mxu0 0.0
    %1442 = vmatpush1.msra.mxu0 0.0
    %1443 = vmatprep.subr.mxu0 0.0
    %1444 = vmatpush1.msra.mxu0 0.0
    %1445 = vmatprep.subr.mxu0 0.0
    %1446 = vmatpush1.msra.mxu0 0.0
    %1447 = vmatprep.subr.mxu0 0.0
    %1448 = vmatpush1.msra.mxu0 0.0
    %1449 = vmatprep.mubr.f32.mxu0 0.0
    %1450 = vmatmul.mubr.f32.gmra.mrb[0].mxu0 %v1383
    %v1451 = vpop.f32.mrb[0].mxu0
    %v1452 = vadd.f32 0.0, %v1451
    %v1453 = vpop.f32.mrb[0].mxu0
    %1454 = vdwg.mxu0
    %v1457 = vrot.slane %v1380, 7
    %v1458 = vsel %vm156, %v1457, %v1379
    %v1459 = vsel %vm79, %v1458, 0
    %1461 = vmatprep.subr.mxu0 0.0
    %1462 = vmatpush1.msra.mxu0 %v67
    %1463 = vmatprep.subr.mxu0 0.0
    %1464 = vmatpush1.msra.mxu0 %v68
    %1465 = vmatprep.subr.mxu0 0.0
    %1466 = vmatpush1.msra.mxu0 %v69
    %1467 = vmatprep.subr.mxu0 0.0
    %1468 = vmatpush1.msra.mxu0 %v70
    %1469 = vmatprep.subr.mxu0 0.0
    %1470 = vmatpush1.msra.mxu0 0.0
    %1471 = vmatprep.subr.mxu0 0.0
    %1472 = vmatpush1.msra.mxu0 0.0
    %1473 = vmatprep.subr.mxu0 0.0
    %1474 = vmatpush1.msra.mxu0 0.0
    %1475 = vmatprep.subr.mxu0 0.0
    %1476 = vmatpush1.msra.mxu0 0.0
    %1477 = vmatprep.subr.mxu0 0.0
    %1478 = vmatpush1.msra.mxu0 0.0
    %1479 = vmatprep.subr.mxu0 0.0
    %1480 = vmatpush1.msra.mxu0 0.0
    %1481 = vmatprep.subr.mxu0 0.0
    %1482 = vmatpush1.msra.mxu0 0.0
    %1483 = vmatprep.subr.mxu0 0.0
    %1484 = vmatpush1.msra.mxu0 0.0
    %1485 = vmatprep.subr.mxu0 0.0
    %1486 = vmatpush1.msra.mxu0 0.0
    %1487 = vmatprep.subr.mxu0 0.0
    %1488 = vmatpush1.msra.mxu0 0.0
    %1489 = vmatprep.subr.mxu0 0.0
    %1490 = vmatpush1.msra.mxu0 0.0
    %1491 = vmatprep.subr.mxu0 0.0
    %1492 = vmatpush1.msra.mxu0 0.0
    %1493 = vmatprep.subr.mxu0 0.0
    %1494 = vmatpush1.msra.mxu0 0.0
    %1495 = vmatprep.subr.mxu0 0.0
    %1496 = vmatpush1.msra.mxu0 0.0
    %1497 = vmatprep.subr.mxu0 0.0
    %1498 = vmatpush1.msra.mxu0 0.0
    %1499 = vmatprep.subr.mxu0 0.0
    %1500 = vmatpush1.msra.mxu0 0.0
    %1501 = vmatprep.subr.mxu0 0.0
    %1502 = vmatpush1.msra.mxu0 0.0
    %1503 = vmatprep.subr.mxu0 0.0
    %1504 = vmatpush1.msra.mxu0 0.0
    %1505 = vmatprep.subr.mxu0 0.0
    %1506 = vmatpush1.msra.mxu0 0.0
    %1507 = vmatprep.subr.mxu0 0.0
    %1508 = vmatpush1.msra.mxu0 0.0
    %1509 = vmatprep.subr.mxu0 0.0
    %1510 = vmatpush1.msra.mxu0 0.0
    %1511 = vmatprep.subr.mxu0 0.0
    %1512 = vmatpush1.msra.mxu0 0.0
    %1513 = vmatprep.subr.mxu0 0.0
    %1514 = vmatpush1.msra.mxu0 0.0
    %1515 = vmatprep.subr.mxu0 0.0
    %1516 = vmatpush1.msra.mxu0 0.0
    %1517 = vmatprep.subr.mxu0 0.0
    %1518 = vmatpush1.msra.mxu0 0.0
    %1519 = vmatprep.subr.mxu0 0.0
    %1520 = vmatpush1.msra.mxu0 0.0
    %1521 = vmatprep.subr.mxu0 0.0
    %1522 = vmatpush1.msra.mxu0 0.0
    %1523 = vmatprep.subr.mxu0 0.0
    %1524 = vmatpush1.msra.mxu0 0.0
    %1525 = vmatprep.mubr.f32.mxu0 0.0
    %1526 = vmatmul.mubr.f32.gmra.mrb[0].mxu0 %v1459
    %v1527 = vpop.f32.mrb[0].mxu0
    %v1528 = vadd.f32 %v1452, %v1527
    %v1529 = vpop.f32.mrb[0].mxu0
    %1530 = vdwg.mxu0
    %v1531 = vadd.f32 %v1528, %v66
    %v1532 = vxor.u32 %v1531, 2147483648
    %v1533 = vmul.f32 %v1532, 1.442695
    %v1534 = vpow.pop %v1533
    %v1535 = vadd.f32 %v1534, 1.0
    %v1536 = vrcp.pop %v1535
    %v1537 = vmul.f32 1.0, %v1536
    %v1538 = vtanh.pop %v1531
    %v1539 = vmul.f32 %v1537, %v1333
    %1541 = vrot.lane.b32.xlu0 %v1538, 64
    %v1542 = vpop.permute.xlu0 %1541
    %v1544 = vmul.f32 %v1537, %v1542
    %1546 = vrot.lane.b32.xlu0 %v1544, 32
    %v1547 = vpop.permute.xlu0 %1546
    %v1549 = vadd.f32 %v1539, %v1547
    %v1550 = vtanh.pop %v1549
    %1552 = vrot.lane.b32.xlu0 %v1550, 64
    %v1553 = vpop.permute.xlu0 %1552
    %v1555 = vmul.f32 %v1537, %v1553
    %v1558 = vunpack.c.l.s4 1966171168
    %v1559 = vunpack.c.0.s8 %v1558
    %v1560 = vlaneseq
    %v1561 = vshrl.u32 %v1560, 7
    %v1562 = vsub.s32 %v1559, %v1561
    %v1563 = vrot.slane %v1555, %v1562
    %v1564 = vcombine.high %v1563, %v1563
    %v1566 = vunpack.c.l.s4 1966171168
    %v1567 = vunpack.c.0.s8 %v1566
    %v1568 = vlaneseq
    %v1569 = vshrl.u32 %v1568, 7
    %v1570 = vsub.s32 %v1567, %v1569
    %v1571 = vrot.slane %v1563, %v1570
    %v1573 = vunpack.c.l.s4 1966171168
    %v1574 = vunpack.c.0.s8 %v1573
    %v1575 = vlaneseq
    %v1576 = vshrl.u32 %v1575, 7
    %v1577 = vsub.s32 %v1574, %v1576
    %v1578 = vrot.slane %v1564, %v1577
    %v1579 = vlaneseq
    %v1580 = vshrl.u32 %v1579, 7
    %v1581 = vsub.s32 0, %v1580
    %v1582 = vrot.slane %v1571, %v1581
    %v1583 = vlaneseq
    %v1584 = vshrl.u32 %v1583, 7
    %v1585 = vsub.s32 0, %v1584
    %v1586 = vrot.slane %v1578, %v1585
    %1587 = vrot.lane.b32.xlu0 %v1582, 32
    %v1588 = vpop.permute.xlu0 %1587
    %1589 = vrot.lane.b32.xlu0 %v1586, 32
    %v1590 = vpop.permute.xlu0 %1589
    %1593 = vst.msk [vmem:[#allocation10 + $0x6] sm:$0x1] %vm296, %v1588
    %1594 = vst.msk [vmem:[#allocation10 + $0xe] sm:$0x1] %vm296, %v1590
    %v1595 = vld [vmem:[#allocation4 + $0x7] sm:$0x1]
    %v1596 = vld [vmem:[#allocation4 + $0xf] sm:$0x1]
    %1597 = vrot.lane.b32.xlu0 %v1555, 32
    %v1598 = vpop.permute.xlu0 %1597
    %v1599 = vsel %vm79, %v1598, 0
    %1601 = vmatprep.subr.mxu0 0.0
    %1602 = vmatpush1.msra.mxu0 %v71
    %1603 = vmatprep.subr.mxu0 0.0
    %1604 = vmatpush1.msra.mxu0 %v72
    %1605 = vmatprep.subr.mxu0 0.0
    %1606 = vmatpush1.msra.mxu0 %v73
    %1607 = vmatprep.subr.mxu0 0.0
    %1608 = vmatpush1.msra.mxu0 %v74
    %1609 = vmatprep.subr.mxu0 0.0
    %1610 = vmatpush1.msra.mxu0 0.0
    %1611 = vmatprep.subr.mxu0 0.0
    %1612 = vmatpush1.msra.mxu0 0.0
    %1613 = vmatprep.subr.mxu0 0.0
    %1614 = vmatpush1.msra.mxu0 0.0
    %1615 = vmatprep.subr.mxu0 0.0
    %1616 = vmatpush1.msra.mxu0 0.0
    %1617 = vmatprep.subr.mxu0 0.0
    %1618 = vmatpush1.msra.mxu0 0.0
    %1619 = vmatprep.subr.mxu0 0.0
    %1620 = vmatpush1.msra.mxu0 0.0
    %1621 = vmatprep.subr.mxu0 0.0
    %1622 = vmatpush1.msra.mxu0 0.0
    %1623 = vmatprep.subr.mxu0 0.0
    %1624 = vmatpush1.msra.mxu0 0.0
    %1625 = vmatprep.subr.mxu0 0.0
    %1626 = vmatpush1.msra.mxu0 0.0
    %1627 = vmatprep.subr.mxu0 0.0
    %1628 = vmatpush1.msra.mxu0 0.0
    %1629 = vmatprep.subr.mxu0 0.0
    %1630 = vmatpush1.msra.mxu0 0.0
    %1631 = vmatprep.subr.mxu0 0.0
    %1632 = vmatpush1.msra.mxu0 0.0
    %1633 = vmatprep.subr.mxu0 0.0
    %1634 = vmatpush1.msra.mxu0 0.0
    %1635 = vmatprep.subr.mxu0 0.0
    %1636 = vmatpush1.msra.mxu0 0.0
    %1637 = vmatprep.subr.mxu0 0.0
    %1638 = vmatpush1.msra.mxu0 0.0
    %1639 = vmatprep.subr.mxu0 0.0
    %1640 = vmatpush1.msra.mxu0 0.0
    %1641 = vmatprep.subr.mxu0 0.0
    %1642 = vmatpush1.msra.mxu0 0.0
    %1643 = vmatprep.subr.mxu0 0.0
    %1644 = vmatpush1.msra.mxu0 0.0
    %1645 = vmatprep.subr.mxu0 0.0
    %1646 = vmatpush1.msra.mxu0 0.0
    %1647 = vmatprep.subr.mxu0 0.0
    %1648 = vmatpush1.msra.mxu0 0.0
    %1649 = vmatprep.subr.mxu0 0.0
    %1650 = vmatpush1.msra.mxu0 0.0
    %1651 = vmatprep.subr.mxu0 0.0
    %1652 = vmatpush1.msra.mxu0 0.0
    %1653 = vmatprep.subr.mxu0 0.0
    %1654 = vmatpush1.msra.mxu0 0.0
    %1655 = vmatprep.subr.mxu0 0.0
    %1656 = vmatpush1.msra.mxu0 0.0
    %1657 = vmatprep.subr.mxu0 0.0
    %1658 = vmatpush1.msra.mxu0 0.0
    %1659 = vmatprep.subr.mxu0 0.0
    %1660 = vmatpush1.msra.mxu0 0.0
    %1661 = vmatprep.subr.mxu0 0.0
    %1662 = vmatpush1.msra.mxu0 0.0
    %1663 = vmatprep.subr.mxu0 0.0
    %1664 = vmatpush1.msra.mxu0 0.0
    %1665 = vmatprep.mubr.f32.mxu0 0.0
    %1666 = vmatmul.mubr.f32.gmra.mrb[0].mxu0 %v1599
    %v1667 = vpop.f32.mrb[0].mxu0
    %v1668 = vadd.f32 0.0, %v1667
    %v1669 = vpop.f32.mrb[0].mxu0
    %1670 = vdwg.mxu0
    %v1673 = vrot.slane %v1596, 7
    %v1674 = vsel %vm156, %v1673, %v1595
    %v1675 = vsel %vm79, %v1674, 0
    %1677 = vmatprep.subr.mxu0 0.0
    %1678 = vmatpush1.msra.mxu0 %v67
    %1679 = vmatprep.subr.mxu0 0.0
    %1680 = vmatpush1.msra.mxu0 %v68
    %1681 = vmatprep.subr.mxu0 0.0
    %1682 = vmatpush1.msra.mxu0 %v69
    %1683 = vmatprep.subr.mxu0 0.0
    %1684 = vmatpush1.msra.mxu0 %v70
    %1685 = vmatprep.subr.mxu0 0.0
    %1686 = vmatpush1.msra.mxu0 0.0
    %1687 = vmatprep.subr.mxu0 0.0
    %1688 = vmatpush1.msra.mxu0 0.0
    %1689 = vmatprep.subr.mxu0 0.0
    %1690 = vmatpush1.msra.mxu0 0.0
    %1691 = vmatprep.subr.mxu0 0.0
    %1692 = vmatpush1.msra.mxu0 0.0
    %1693 = vmatprep.subr.mxu0 0.0
    %1694 = vmatpush1.msra.mxu0 0.0
    %1695 = vmatprep.subr.mxu0 0.0
    %1696 = vmatpush1.msra.mxu0 0.0
    %1697 = vmatprep.subr.mxu0 0.0
    %1698 = vmatpush1.msra.mxu0 0.0
    %1699 = vmatprep.subr.mxu0 0.0
    %1700 = vmatpush1.msra.mxu0 0.0
    %1701 = vmatprep.subr.mxu0 0.0
    %1702 = vmatpush1.msra.mxu0 0.0
    %1703 = vmatprep.subr.mxu0 0.0
    %1704 = vmatpush1.msra.mxu0 0.0
    %1705 = vmatprep.subr.mxu0 0.0
    %1706 = vmatpush1.msra.mxu0 0.0
    %1707 = vmatprep.subr.mxu0 0.0
    %1708 = vmatpush1.msra.mxu0 0.0
    %1709 = vmatprep.subr.mxu0 0.0
    %1710 = vmatpush1.msra.mxu0 0.0
    %1711 = vmatprep.subr.mxu0 0.0
    %1712 = vmatpush1.msra.mxu0 0.0
    %1713 = vmatprep.subr.mxu0 0.0
    %1714 = vmatpush1.msra.mxu0 0.0
    %1715 = vmatprep.subr.mxu0 0.0
    %1716 = vmatpush1.msra.mxu0 0.0
    %1717 = vmatprep.subr.mxu0 0.0
    %1718 = vmatpush1.msra.mxu0 0.0
    %1719 = vmatprep.subr.mxu0 0.0
    %1720 = vmatpush1.msra.mxu0 0.0
    %1721 = vmatprep.subr.mxu0 0.0
    %1722 = vmatpush1.msra.mxu0 0.0
    %1723 = vmatprep.subr.mxu0 0.0
    %1724 = vmatpush1.msra.mxu0 0.0
    %1725 = vmatprep.subr.mxu0 0.0
    %1726 = vmatpush1.msra.mxu0 0.0
    %1727 = vmatprep.subr.mxu0 0.0
    %1728 = vmatpush1.msra.mxu0 0.0
    %1729 = vmatprep.subr.mxu0 0.0
    %1730 = vmatpush1.msra.mxu0 0.0
    %1731 = vmatprep.subr.mxu0 0.0
    %1732 = vmatpush1.msra.mxu0 0.0
    %1733 = vmatprep.subr.mxu0 0.0
    %1734 = vmatpush1.msra.mxu0 0.0
    %1735 = vmatprep.subr.mxu0 0.0
    %1736 = vmatpush1.msra.mxu0 0.0
    %1737 = vmatprep.subr.mxu0 0.0
    %1738 = vmatpush1.msra.mxu0 0.0
    %1739 = vmatprep.subr.mxu0 0.0
    %1740 = vmatpush1.msra.mxu0 0.0
    %1741 = vmatprep.mubr.f32.mxu0 0.0
    %1742 = vmatmul.mubr.f32.gmra.mrb[0].mxu0 %v1675
    %v1743 = vpop.f32.mrb[0].mxu0
    %v1744 = vadd.f32 %v1668, %v1743
    %v1745 = vpop.f32.mrb[0].mxu0
    %1746 = vdwg.mxu0
    %v1747 = vadd.f32 %v1744, %v66
    %v1748 = vxor.u32 %v1747, 2147483648
    %v1749 = vmul.f32 %v1748, 1.442695
    %v1750 = vpow.pop %v1749
    %v1751 = vadd.f32 %v1750, 1.0
    %v1752 = vrcp.pop %v1751
    %v1753 = vmul.f32 1.0, %v1752
    %v1754 = vtanh.pop %v1747
    %v1755 = vmul.f32 %v1753, %v1549
    %1757 = vrot.lane.b32.xlu0 %v1754, 64
    %v1758 = vpop.permute.xlu0 %1757
    %v1760 = vmul.f32 %v1753, %v1758
    %1762 = vrot.lane.b32.xlu0 %v1760, 32
    %v1763 = vpop.permute.xlu0 %1762
    %v1765 = vadd.f32 %v1755, %v1763
    %v1766 = vtanh.pop %v1765
    %1768 = vrot.lane.b32.xlu0 %v1766, 64
    %v1769 = vpop.permute.xlu0 %1768
    %v1771 = vmul.f32 %v1753, %v1769
    %v1774 = vunpack.c.l.s4 1966171168
    %v1775 = vunpack.c.0.s8 %v1774
    %v1776 = vlaneseq
    %v1777 = vshrl.u32 %v1776, 7
    %v1778 = vsub.s32 %v1775, %v1777
    %v1779 = vrot.slane %v1771, %v1778
    %v1780 = vcombine.high %v1779, %v1779
    %v1782 = vunpack.c.l.s4 1966171168
    %v1783 = vunpack.c.0.s8 %v1782
    %v1784 = vlaneseq
    %v1785 = vshrl.u32 %v1784, 7
    %v1786 = vsub.s32 %v1783, %v1785
    %v1787 = vrot.slane %v1779, %v1786
    %v1789 = vunpack.c.l.s4 1966171168
    %v1790 = vunpack.c.0.s8 %v1789
    %v1791 = vlaneseq
    %v1792 = vshrl.u32 %v1791, 7
    %v1793 = vsub.s32 %v1790, %v1792
    %v1794 = vrot.slane %v1780, %v1793
    %v1795 = vlaneseq
    %v1796 = vshrl.u32 %v1795, 7
    %v1797 = vsub.s32 0, %v1796
    %v1798 = vrot.slane %v1787, %v1797
    %v1799 = vlaneseq
    %v1800 = vshrl.u32 %v1799, 7
    %v1801 = vsub.s32 0, %v1800
    %v1802 = vrot.slane %v1794, %v1801
    %1803 = vrot.lane.b32.xlu0 %v1798, 32
    %v1804 = vpop.permute.xlu0 %1803
    %1805 = vrot.lane.b32.xlu0 %v1802, 32
    %v1806 = vpop.permute.xlu0 %1805
    %1809 = vst.msk [vmem:[#allocation10 + $0x7] sm:$0x1] %vm296, %v1804
    %1810 = vst.msk [vmem:[#allocation10 + $0xf] sm:$0x1] %vm296, %v1806
    %1811 = vrot.lane.b32.xlu0 %v1771, 32
    %v1812 = vpop.permute.xlu0 %1811
    %vm1814 = vcmask 254976
    %1815 = vst.msk [vmem:[#allocation2] sm:$0x3] %vm1814, %v1812
    %1817 = vrot.lane.b32.xlu0 %v1765, 96
    %v1818 = vpop.permute.xlu0 %1817
    %1820 = vst.msk [vmem:[#allocation3] sm:$0x3] %vm1814, %v1818
    // Predicated region
    $region34: #{tpu_custom_call.1} parent=1 // pred_check
      _
    $region35: #{tpu_custom_call.1} parent=1 // pred_check_branch
      %1822 = sbr.rel (0) target = $region37
    $region36: #{tpu_custom_call.1} parent=1 // pred_region
      %s1824 = ssub.s32 256, 256
      %1825 = vsyncadd [#allocation6], %s1824
      %s1826 = sshll.u32 [#allocation10], 4
      %s1827 = int_to_ptr.vmem [resolvable:$true] %s1826
      %1832 = dma.vmem_to_hbm [thread:$0]  %s1827, 256, %s4, [#allocation6], 128, 128, 8
    $region37: #{tpu_custom_call.1} parent=1 // pred_fallthru
      _
    // Predicated region
    $region38: #{tpu_custom_call.1} parent=1 // pred_check
      _
    $region39: #{tpu_custom_call.1} parent=1 // pred_check_branch
      %1834 = sbr.rel (0) target = $region41
    $region40: #{tpu_custom_call.1} parent=1 // pred_region
      %1835 = dma.done [#allocation6], 256
    $region41: #{tpu_custom_call.1} parent=1 // pred_fallthru
      _
    %1836 = vsyncpa [#allocation5], 1
    %1837 = vsyncpa [#allocation8], 1
    %1838 = vsyncpa [#allocation6], 1

</llo_original>
